<compile_context>
chip_gen: v5e
topology: v5e:2x2
jax: 0.10.0
libtpu: 0.0.40
codegen_flags: <defaults>
</compile_context>

<pallas_src>
import functools

import jax
import jax.numpy as jnp
from jax import lax
from jax.experimental import pallas as pl
from jax.experimental.pallas import tpu as pltpu


def lstm_chunk_kernel(pre_ref, whh_ref, *refs, hidden_size, time_chunk,
                      collect_outputs):
    """One LSTM layer, Tc timesteps per grid step. Grid axis 0 = time chunks.

    pre_ref : (Tc, B, 4H) f32   precomputed x_t @ W_ih^T + bias
    whh_ref : (H, 4H)     bf16  hidden->gates weight (transposed vs PyTorch)
    out_ref : (Tc, B, H)  bf16  per-timestep hidden outputs (only if
                                collect_outputs)
    hT_ref  : (B, H)      f32   final hidden state (written once, last chunk)
    cT_ref  : (B, H)      f32   final cell state   (written once, last chunk)
    h_sc, c_sc : (B, H)   f32   VMEM scratch carrying state across chunks
    """
    if collect_outputs:
        out_ref, hT_ref, cT_ref, h_sc, c_sc = refs
    else:
        out_ref = None
        hT_ref, cT_ref, h_sc, c_sc = refs

    H = hidden_size
    B = h_sc.shape[0]
    chunk = pl.program_id(0)

    @pl.when(chunk == 0)
    def _():
        h_sc[...] = jnp.zeros_like(h_sc)
        c_sc[...] = jnp.zeros_like(c_sc)

    whh = whh_ref[...]  # hoisted: read the resident weight once per chunk

    use_slices = (H % 128 == 0)  # lane-aligned slices are free; else mask-select
    if not use_slices:
        lane = lax.broadcasted_iota(jnp.int32, (B, 4 * H), 1)
        g_mask = jnp.logical_and(lane >= 2 * H, lane < 3 * H)

    def step(t, carry):
        # (B, 4H) f32 gates: hoisted input projection + recurrent matmul (bf16 MXU).
        gates = pre_ref[t] + jnp.dot(
            h_sc[...].astype(jnp.bfloat16), whh,
            preferred_element_type=jnp.float32)

        if use_slices:
            i_g = jax.nn.sigmoid(gates[:, 0 * H:1 * H])
            f_g = jax.nn.sigmoid(gates[:, 1 * H:2 * H])
            g_g = jnp.tanh(gates[:, 2 * H:3 * H])
            o_g = jax.nn.sigmoid(gates[:, 3 * H:4 * H])
        else:
            # Two full-vreg EUP ops + one VPU select instead of four sub-vreg ones.
            acts = jnp.where(g_mask, jnp.tanh(gates), jax.nn.sigmoid(gates))
            i_g = acts[:, 0 * H:1 * H]
            f_g = acts[:, 1 * H:2 * H]
            g_g = acts[:, 2 * H:3 * H]
            o_g = acts[:, 3 * H:4 * H]

        c_new = f_g * c_sc[...] + i_g * g_g
        h_new = o_g * jnp.tanh(c_new)

        c_sc[...] = c_new
        h_sc[...] = h_new
        if collect_outputs:
            out_ref[t] = h_new.astype(out_ref.dtype)
        return carry

    lax.fori_loop(0, time_chunk, step, 0, unroll=True)

    @pl.when(chunk == pl.num_programs(0) - 1)
    def _():
        hT_ref[...] = h_sc[...]
        cT_ref[...] = c_sc[...]


def _pick_time_chunk(T, max_chunk):
    for c in range(min(T, max_chunk), 0, -1):
        if T % c == 0:
            return c
    return 1


def lstm_layer(x_seq, w_ih_t, w_hh_t, bias, hidden_size, *,
               collect_outputs=True, max_time_chunk=8):
    """Runs one LSTM layer over a (T, B, E) sequence.

    Returns (out_seq (T,B,H) bf16 or None, h_T (B,H) f32, c_T (B,H) f32).
    """
    T, B, E = x_seq.shape
    H = hidden_size

    # Hoisted input projection: one big MXU matmul over the whole sequence.
    pre = jnp.dot(x_seq.reshape(T * B, E).astype(jnp.bfloat16), w_ih_t,
                  preferred_element_type=jnp.float32)
    pre = pre.reshape(T, B, 4 * H) + bias          # bias (1, 4H) broadcasts

    Tc = _pick_time_chunk(T, max_time_chunk)
    kernel = functools.partial(lstm_chunk_kernel, hidden_size=H,
                               time_chunk=Tc, collect_outputs=collect_outputs)

    out_shapes = []
    out_specs = []
    if collect_outputs:
        # bf16 intermediate sequence: next layer casts to bf16 anyway.
        out_shapes.append(jax.ShapeDtypeStruct((T, B, H), jnp.bfloat16))
        out_specs.append(pl.BlockSpec((Tc, B, H), lambda t: (t, 0, 0)))
    out_shapes += [jax.ShapeDtypeStruct((B, H), jnp.float32),   # h_T
                   jax.ShapeDtypeStruct((B, H), jnp.float32)]   # c_T
    out_specs += [pl.BlockSpec((B, H), lambda t: (0, 0)),       # resident
                  pl.BlockSpec((B, H), lambda t: (0, 0))]       # resident

    results = pl.pallas_call(
        kernel,
        out_shape=tuple(out_shapes),
        grid_spec=pltpu.PrefetchScalarGridSpec(
            num_scalar_prefetch=0,
            grid=(T // Tc,),
            in_specs=[
                pl.BlockSpec((Tc, B, 4 * H), lambda t: (t, 0, 0)),  # pre_gates chunk
                pl.BlockSpec((H, 4 * H), lambda t: (0, 0)),         # W_hh^T (resident)
            ],
            out_specs=out_specs,
            scratch_shapes=[
                pltpu.VMEM((B, H), jnp.float32),                    # h carry
                pltpu.VMEM((B, H), jnp.float32),                    # c carry
            ],
        ),
        compiler_params=pltpu.CompilerParams(
            dimension_semantics=("arbitrary",)),   # time is a sequential carry
    )(pre, w_hh_t)

    if collect_outputs:
        out_seq, h_T, c_T = results
    else:
        out_seq = None
        h_T, c_T = results
    return out_seq, h_T, c_T


def init_encoder_params(key, input_size, embedding_size, hidden_size, num_layers):
    """Deterministic parameter init matching PyTorch module shapes."""
    params = {}
    k_emb, key = jax.random.split(key)
    # nn.Embedding default: N(0, 1)
    params["embedding"] = jax.random.normal(
        k_emb, (input_size, embedding_size), jnp.float32)

    bound = 1.0 / (hidden_size ** 0.5)   # PyTorch LSTM init: U(-1/sqrt(H), 1/sqrt(H))
    layers = []
    for layer in range(num_layers):
        in_dim = embedding_size if layer == 0 else hidden_size
        k1, k2, k3, k4, key = jax.random.split(key, 5)
        w_ih = jax.random.uniform(k1, (4 * hidden_size, in_dim),
                                  jnp.float32, -bound, bound)
        w_hh = jax.random.uniform(k2, (4 * hidden_size, hidden_size),
                                  jnp.float32, -bound, bound)
        b_ih = jax.random.uniform(k3, (4 * hidden_size,), jnp.float32, -bound, bound)
        b_hh = jax.random.uniform(k4, (4 * hidden_size,), jnp.float32, -bound, bound)
        layers.append({
            # bf16 weights: MXU-native on v5e/v6e/v7x, halves VMEM residency.
            "w_ih_t": jnp.transpose(w_ih).astype(jnp.bfloat16),     # (in, 4H)
            "w_hh_t": jnp.transpose(w_hh).astype(jnp.bfloat16),     # (H, 4H)
            "bias": (b_ih + b_hh).reshape(1, 4 * hidden_size),      # (1, 4H) f32
        })
    params["layers"] = layers
    return params


def encoder_forward(params, x, hidden_size, num_layers, max_time_chunk=8):
    """x: (T, B) int32 token ids  ->  (hidden, cell): each (num_layers, B, H)."""
    # Embedding lookup (glue) + dropout (identity in eval mode).
    emb = jnp.take(params["embedding"], x, axis=0)   # (T, B, E)
    layer_in = emb
    hs, cs = [], []
    for layer in range(num_layers):
        p = params["layers"][layer]
        is_last = (layer == num_layers - 1)
        out_seq, h_T, c_T = lstm_layer(
            layer_in, p["w_ih_t"], p["w_hh_t"], p["bias"], hidden_size,
            collect_outputs=not is_last, max_time_chunk=max_time_chunk)
        hs.append(h_T)
        cs.append(c_T)
        if not is_last:
            layer_in = out_seq   # inter-layer dropout is identity in eval mode
    hidden = jnp.stack(hs, axis=0)   # (num_layers, B, H)
    cell = jnp.stack(cs, axis=0)     # (num_layers, B, H)
    return hidden, cell


if __name__ == "__main__":
    # Small, TPU-friendly shapes consistent with the module's forward.
    # H=128 keeps the state/output last dim lane-dense (multiple of 128).
    INPUT_SIZE = 50        # vocab
    EMBEDDING_SIZE = 64
    HIDDEN_SIZE = 128
    NUM_LAYERS = 2
    SEQ_LEN = 16
    BATCH = 8

    key = jax.random.PRNGKey(0)
    k_params, k_x = jax.random.split(key)
    params = init_encoder_params(
        k_params, INPUT_SIZE, EMBEDDING_SIZE, HIDDEN_SIZE, NUM_LAYERS)
    x = jax.random.randint(k_x, (SEQ_LEN, BATCH), 0, INPUT_SIZE, jnp.int32)

    hidden, cell = encoder_forward(params, x, HIDDEN_SIZE, NUM_LAYERS)
    jax.block_until_ready((hidden, cell))

    assert hidden.shape == (NUM_LAYERS, BATCH, HIDDEN_SIZE)
    assert cell.shape == (NUM_LAYERS, BATCH, HIDDEN_SIZE)
    assert bool(jnp.all(jnp.isfinite(hidden))) and bool(jnp.all(jnp.isfinite(cell)))
    print("KERNEL_OK")
</pallas_src>

<mosaic_0001>
module attributes {stable_mosaic.version = 11 : i64} {
  func.func @lstm_chunk_kernel(%arg0: i32, %arg1: memref<8x8x512xf32, #tpu.memory_space<vmem>>, %arg2: memref<128x512xbf16, #tpu.memory_space<vmem>>, %arg3: memref<8x8x128xbf16, #tpu.memory_space<vmem>>, %arg4: memref<8x128xf32, #tpu.memory_space<vmem>>, %arg5: memref<8x128xf32, #tpu.memory_space<vmem>>, %arg6: memref<8x128xf32, #tpu.memory_space<vmem>>, %arg7: memref<8x128xf32, #tpu.memory_space<vmem>>) attributes {dimension_semantics = [#tpu.dimension_semantics<arbitrary>], iteration_bounds = array<i64: 2>, scalar_prefetch = 0 : i64, scratch_operands = 2 : i64, tpu.core_type = #tpu.core_type<tc>, window_params = [{transform_indices = @transform_0, window_bounds = array<i64: 8, 8, 512>}, {pipeline_mode = #tpu.pipeline_mode<synchronous>, transform_indices = @transform_1, window_bounds = array<i64: 128, 512>}, {transform_indices = @transform_2, window_bounds = array<i64: 8, 8, 128>}, {pipeline_mode = #tpu.pipeline_mode<synchronous>, transform_indices = @transform_3, window_bounds = array<i64: 8, 128>}, {pipeline_mode = #tpu.pipeline_mode<synchronous>, transform_indices = @transform_4, window_bounds = array<i64: 8, 128>}]} {
    %c0_i32 = arith.constant 0 : i32
    %0 = arith.cmpi eq, %arg0, %c0_i32 : i32
    %1 = arith.extui %0 : i1 to i32
    %c0_i32_0 = arith.constant 0 : i32
    %2 = arith.cmpi ne, %1, %c0_i32_0 : i32
    scf.if %2 {
      %cst_132 = arith.constant 0.000000e+00 : f32
      %327 = vector.broadcast %cst_132 : f32 to vector<8x128xf32>
      %c0_133 = arith.constant 0 : index
      %c0_134 = arith.constant 0 : index
      %328 = vector.load %arg6[%c0_133, %c0_134] : memref<8x128xf32, #tpu.memory_space<vmem>>, vector<8x128xf32>
      tpu.vector_store %arg6[%c0_133, %c0_134], %327 {strides = array<i32>} : memref<8x128xf32, #tpu.memory_space<vmem>>, vector<8x128xf32>,
      %cst_135 = arith.constant 0.000000e+00 : f32
      %329 = vector.broadcast %cst_135 : f32 to vector<8x128xf32>
      %c0_136 = arith.constant 0 : index
      %c0_137 = arith.constant 0 : index
      %330 = vector.load %arg7[%c0_136, %c0_137] : memref<8x128xf32, #tpu.memory_space<vmem>>, vector<8x128xf32>
      tpu.vector_store %arg7[%c0_136, %c0_137], %329 {strides = array<i32>} : memref<8x128xf32, #tpu.memory_space<vmem>>, vector<8x128xf32>,
    } else {
    }
    %c0 = arith.constant 0 : index
    %c0_1 = arith.constant 0 : index
    %3 = vector.load %arg2[%c0, %c0_1] : memref<128x512xbf16, #tpu.memory_space<vmem>>, vector<128x512xbf16>
    %c0_i32_2 = arith.constant 0 : i32
    %4 = arith.index_cast %c0_i32_2 : i32 to index
    %c0_3 = arith.constant 0 : index
    %c0_4 = arith.constant 0 : index
    %5 = vector.load %arg1[%4, %c0_3, %c0_4] : memref<8x8x512xf32, #tpu.memory_space<vmem>>, vector<1x8x512xf32>
    %6 = vector.shape_cast %5 : vector<1x8x512xf32> to vector<8x512xf32>
    %c0_5 = arith.constant 0 : index
    %c0_6 = arith.constant 0 : index
    %7 = vector.load %arg6[%c0_5, %c0_6] : memref<8x128xf32, #tpu.memory_space<vmem>>, vector<8x128xf32>
    %8 = arith.truncf %7 : vector<8x128xf32> to vector<8x128xbf16>
    %cst = arith.constant dense<0.000000e+00> : vector<8x512xf32>
    %9 = tpu.matmul %8, %3, %cst {dimension_numbers = #tpu.dot_dimension_numbers<[1], [0], [0], [1], [0, 0, 1, 1], [], []>} : vector<8x128xbf16>, vector<128x512xbf16>, vector<8x512xf32> -> vector<8x512xf32>
    %10 = arith.addf %6, %9 : vector<8x512xf32>
    %11 = vector.extract_strided_slice %10 {offsets = [0, 0], sizes = [8, 128], strides = [1, 1]} : vector<8x512xf32> to vector<8x128xf32>
    %12 = arith.negf %11 : vector<8x128xf32>
    %13 = math.exp %12 : vector<8x128xf32>
    %cst_7 = arith.constant 1.000000e+00 : f32
    %14 = vector.broadcast %cst_7 : f32 to vector<8x128xf32>
    %15 = arith.addf %14, %13 : vector<8x128xf32>
    %16 = arith.divf %14, %15 : vector<8x128xf32>
    %17 = vector.extract_strided_slice %10 {offsets = [0, 128], sizes = [8, 128], strides = [1, 1]} : vector<8x512xf32> to vector<8x128xf32>
    %18 = arith.negf %17 : vector<8x128xf32>
    %19 = math.exp %18 : vector<8x128xf32>
    %cst_8 = arith.constant 1.000000e+00 : f32
    %20 = vector.broadcast %cst_8 : f32 to vector<8x128xf32>
    %21 = arith.addf %20, %19 : vector<8x128xf32>
    %22 = arith.divf %20, %21 : vector<8x128xf32>
    %23 = vector.extract_strided_slice %10 {offsets = [0, 256], sizes = [8, 128], strides = [1, 1]} : vector<8x512xf32> to vector<8x128xf32>
    %24 = math.tanh %23 : vector<8x128xf32>
    %25 = vector.extract_strided_slice %10 {offsets = [0, 384], sizes = [8, 128], strides = [1, 1]} : vector<8x512xf32> to vector<8x128xf32>
    %26 = arith.negf %25 : vector<8x128xf32>
    %27 = math.exp %26 : vector<8x128xf32>
    %cst_9 = arith.constant 1.000000e+00 : f32
    %28 = vector.broadcast %cst_9 : f32 to vector<8x128xf32>
    %29 = arith.addf %28, %27 : vector<8x128xf32>
    %30 = arith.divf %28, %29 : vector<8x128xf32>
    %c0_10 = arith.constant 0 : index
    %c0_11 = arith.constant 0 : index
    %31 = vector.load %arg7[%c0_10, %c0_11] : memref<8x128xf32, #tpu.memory_space<vmem>>, vector<8x128xf32>
    %32 = arith.mulf %22, %31 : vector<8x128xf32>
    %33 = arith.mulf %16, %24 : vector<8x128xf32>
    %34 = arith.addf %32, %33 : vector<8x128xf32>
    %35 = math.tanh %34 : vector<8x128xf32>
    %36 = arith.mulf %30, %35 : vector<8x128xf32>
    %c0_12 = arith.constant 0 : index
    %c0_13 = arith.constant 0 : index
    %37 = vector.load %arg7[%c0_12, %c0_13] : memref<8x128xf32, #tpu.memory_space<vmem>>, vector<8x128xf32>
    tpu.vector_store %arg7[%c0_12, %c0_13], %34 {strides = array<i32>} : memref<8x128xf32, #tpu.memory_space<vmem>>, vector<8x128xf32>,
    %c0_14 = arith.constant 0 : index
    %c0_15 = arith.constant 0 : index
    %38 = vector.load %arg6[%c0_14, %c0_15] : memref<8x128xf32, #tpu.memory_space<vmem>>, vector<8x128xf32>
    tpu.vector_store %arg6[%c0_14, %c0_15], %36 {strides = array<i32>} : memref<8x128xf32, #tpu.memory_space<vmem>>, vector<8x128xf32>,
    %39 = arith.truncf %36 : vector<8x128xf32> to vector<8x128xbf16>
    %40 = arith.index_cast %c0_i32_2 : i32 to index
    %c0_16 = arith.constant 0 : index
    %c0_17 = arith.constant 0 : index
    %41 = vector.load %arg3[%40, %c0_16, %c0_17] : memref<8x8x128xbf16, #tpu.memory_space<vmem>>, vector<1x8x128xbf16>
    %42 = vector.shape_cast %41 : vector<1x8x128xbf16> to vector<8x128xbf16>
    %43 = vector.shape_cast %39 : vector<8x128xbf16> to vector<1x8x128xbf16>
    tpu.vector_store %arg3[%40, %c0_16, %c0_17], %43 {strides = array<i32>} : memref<8x8x128xbf16, #tpu.memory_space<vmem>>, vector<1x8x128xbf16>,
    %c1_i32 = arith.constant 1 : i32
    %44 = arith.index_cast %c1_i32 : i32 to index
    %c0_18 = arith.constant 0 : index
    %c0_19 = arith.constant 0 : index
    %45 = vector.load %arg1[%44, %c0_18, %c0_19] : memref<8x8x512xf32, #tpu.memory_space<vmem>>, vector<1x8x512xf32>
    %46 = vector.shape_cast %45 : vector<1x8x512xf32> to vector<8x512xf32>
    %c0_20 = arith.constant 0 : index
    %c0_21 = arith.constant 0 : index
    %47 = vector.load %arg6[%c0_20, %c0_21] : memref<8x128xf32, #tpu.memory_space<vmem>>, vector<8x128xf32>
    %48 = arith.truncf %47 : vector<8x128xf32> to vector<8x128xbf16>
    %cst_22 = arith.constant dense<0.000000e+00> : vector<8x512xf32>
    %49 = tpu.matmul %48, %3, %cst_22 {dimension_numbers = #tpu.dot_dimension_numbers<[1], [0], [0], [1], [0, 0, 1, 1], [], []>} : vector<8x128xbf16>, vector<128x512xbf16>, vector<8x512xf32> -> vector<8x512xf32>
    %50 = arith.addf %46, %49 : vector<8x512xf32>
    %51 = vector.extract_strided_slice %50 {offsets = [0, 0], sizes = [8, 128], strides = [1, 1]} : vector<8x512xf32> to vector<8x128xf32>
    %52 = arith.negf %51 : vector<8x128xf32>
    %53 = math.exp %52 : vector<8x128xf32>
    %cst_23 = arith.constant 1.000000e+00 : f32
    %54 = vector.broadcast %cst_23 : f32 to vector<8x128xf32>
    %55 = arith.addf %54, %53 : vector<8x128xf32>
    %56 = arith.divf %54, %55 : vector<8x128xf32>
    %57 = vector.extract_strided_slice %50 {offsets = [0, 128], sizes = [8, 128], strides = [1, 1]} : vector<8x512xf32> to vector<8x128xf32>
    %58 = arith.negf %57 : vector<8x128xf32>
    %59 = math.exp %58 : vector<8x128xf32>
    %cst_24 = arith.constant 1.000000e+00 : f32
    %60 = vector.broadcast %cst_24 : f32 to vector<8x128xf32>
    %61 = arith.addf %60, %59 : vector<8x128xf32>
    %62 = arith.divf %60, %61 : vector<8x128xf32>
    %63 = vector.extract_strided_slice %50 {offsets = [0, 256], sizes = [8, 128], strides = [1, 1]} : vector<8x512xf32> to vector<8x128xf32>
    %64 = math.tanh %63 : vector<8x128xf32>
    %65 = vector.extract_strided_slice %50 {offsets = [0, 384], sizes = [8, 128], strides = [1, 1]} : vector<8x512xf32> to vector<8x128xf32>
    %66 = arith.negf %65 : vector<8x128xf32>
    %67 = math.exp %66 : vector<8x128xf32>
    %cst_25 = arith.constant 1.000000e+00 : f32
    %68 = vector.broadcast %cst_25 : f32 to vector<8x128xf32>
    %69 = arith.addf %68, %67 : vector<8x128xf32>
    %70 = arith.divf %68, %69 : vector<8x128xf32>
    %c0_26 = arith.constant 0 : index
    %c0_27 = arith.constant 0 : index
    %71 = vector.load %arg7[%c0_26, %c0_27] : memref<8x128xf32, #tpu.memory_space<vmem>>, vector<8x128xf32>
    %72 = arith.mulf %62, %71 : vector<8x128xf32>
    %73 = arith.mulf %56, %64 : vector<8x128xf32>
    %74 = arith.addf %72, %73 : vector<8x128xf32>
    %75 = math.tanh %74 : vector<8x128xf32>
    %76 = arith.mulf %70, %75 : vector<8x128xf32>
    %c0_28 = arith.constant 0 : index
    %c0_29 = arith.constant 0 : index
    %77 = vector.load %arg7[%c0_28, %c0_29] : memref<8x128xf32, #tpu.memory_space<vmem>>, vector<8x128xf32>
    tpu.vector_store %arg7[%c0_28, %c0_29], %74 {strides = array<i32>} : memref<8x128xf32, #tpu.memory_space<vmem>>, vector<8x128xf32>,
    %c0_30 = arith.constant 0 : index
    %c0_31 = arith.constant 0 : index
    %78 = vector.load %arg6[%c0_30, %c0_31] : memref<8x128xf32, #tpu.memory_space<vmem>>, vector<8x128xf32>
    tpu.vector_store %arg6[%c0_30, %c0_31], %76 {strides = array<i32>} : memref<8x128xf32, #tpu.memory_space<vmem>>, vector<8x128xf32>,
    %79 = arith.truncf %76 : vector<8x128xf32> to vector<8x128xbf16>
    %80 = arith.index_cast %c1_i32 : i32 to index
    %c0_32 = arith.constant 0 : index
    %c0_33 = arith.constant 0 : index
    %81 = vector.load %arg3[%80, %c0_32, %c0_33] : memref<8x8x128xbf16, #tpu.memory_space<vmem>>, vector<1x8x128xbf16>
    %82 = vector.shape_cast %81 : vector<1x8x128xbf16> to vector<8x128xbf16>
    %83 = vector.shape_cast %79 : vector<8x128xbf16> to vector<1x8x128xbf16>
    tpu.vector_store %arg3[%80, %c0_32, %c0_33], %83 {strides = array<i32>} : memref<8x8x128xbf16, #tpu.memory_space<vmem>>, vector<1x8x128xbf16>,
    %c2_i32 = arith.constant 2 : i32
    %84 = arith.index_cast %c2_i32 : i32 to index
    %c0_34 = arith.constant 0 : index
    %c0_35 = arith.constant 0 : index
    %85 = vector.load %arg1[%84, %c0_34, %c0_35] : memref<8x8x512xf32, #tpu.memory_space<vmem>>, vector<1x8x512xf32>
    %86 = vector.shape_cast %85 : vector<1x8x512xf32> to vector<8x512xf32>
    %c0_36 = arith.constant 0 : index
    %c0_37 = arith.constant 0 : index
    %87 = vector.load %arg6[%c0_36, %c0_37] : memref<8x128xf32, #tpu.memory_space<vmem>>, vector<8x128xf32>
    %88 = arith.truncf %87 : vector<8x128xf32> to vector<8x128xbf16>
    %cst_38 = arith.constant dense<0.000000e+00> : vector<8x512xf32>
    %89 = tpu.matmul %88, %3, %cst_38 {dimension_numbers = #tpu.dot_dimension_numbers<[1], [0], [0], [1], [0, 0, 1, 1], [], []>} : vector<8x128xbf16>, vector<128x512xbf16>, vector<8x512xf32> -> vector<8x512xf32>
    %90 = arith.addf %86, %89 : vector<8x512xf32>
    %91 = vector.extract_strided_slice %90 {offsets = [0, 0], sizes = [8, 128], strides = [1, 1]} : vector<8x512xf32> to vector<8x128xf32>
    %92 = arith.negf %91 : vector<8x128xf32>
    %93 = math.exp %92 : vector<8x128xf32>
    %cst_39 = arith.constant 1.000000e+00 : f32
    %94 = vector.broadcast %cst_39 : f32 to vector<8x128xf32>
    %95 = arith.addf %94, %93 : vector<8x128xf32>
    %96 = arith.divf %94, %95 : vector<8x128xf32>
    %97 = vector.extract_strided_slice %90 {offsets = [0, 128], sizes = [8, 128], strides = [1, 1]} : vector<8x512xf32> to vector<8x128xf32>
    %98 = arith.negf %97 : vector<8x128xf32>
    %99 = math.exp %98 : vector<8x128xf32>
    %cst_40 = arith.constant 1.000000e+00 : f32
    %100 = vector.broadcast %cst_40 : f32 to vector<8x128xf32>
    %101 = arith.addf %100, %99 : vector<8x128xf32>
    %102 = arith.divf %100, %101 : vector<8x128xf32>
    %103 = vector.extract_strided_slice %90 {offsets = [0, 256], sizes = [8, 128], strides = [1, 1]} : vector<8x512xf32> to vector<8x128xf32>
    %104 = math.tanh %103 : vector<8x128xf32>
    %105 = vector.extract_strided_slice %90 {offsets = [0, 384], sizes = [8, 128], strides = [1, 1]} : vector<8x512xf32> to vector<8x128xf32>
    %106 = arith.negf %105 : vector<8x128xf32>
    %107 = math.exp %106 : vector<8x128xf32>
    %cst_41 = arith.constant 1.000000e+00 : f32
    %108 = vector.broadcast %cst_41 : f32 to vector<8x128xf32>
    %109 = arith.addf %108, %107 : vector<8x128xf32>
    %110 = arith.divf %108, %109 : vector<8x128xf32>
    %c0_42 = arith.constant 0 : index
    %c0_43 = arith.constant 0 : index
    %111 = vector.load %arg7[%c0_42, %c0_43] : memref<8x128xf32, #tpu.memory_space<vmem>>, vector<8x128xf32>
    %112 = arith.mulf %102, %111 : vector<8x128xf32>
    %113 = arith.mulf %96, %104 : vector<8x128xf32>
    %114 = arith.addf %112, %113 : vector<8x128xf32>
    %115 = math.tanh %114 : vector<8x128xf32>
    %116 = arith.mulf %110, %115 : vector<8x128xf32>
    %c0_44 = arith.constant 0 : index
    %c0_45 = arith.constant 0 : index
    %117 = vector.load %arg7[%c0_44, %c0_45] : memref<8x128xf32, #tpu.memory_space<vmem>>, vector<8x128xf32>
    tpu.vector_store %arg7[%c0_44, %c0_45], %114 {strides = array<i32>} : memref<8x128xf32, #tpu.memory_space<vmem>>, vector<8x128xf32>,
    %c0_46 = arith.constant 0 : index
    %c0_47 = arith.constant 0 : index
    %118 = vector.load %arg6[%c0_46, %c0_47] : memref<8x128xf32, #tpu.memory_space<vmem>>, vector<8x128xf32>
    tpu.vector_store %arg6[%c0_46, %c0_47], %116 {strides = array<i32>} : memref<8x128xf32, #tpu.memory_space<vmem>>, vector<8x128xf32>,
    %119 = arith.truncf %116 : vector<8x128xf32> to vector<8x128xbf16>
    %120 = arith.index_cast %c2_i32 : i32 to index
    %c0_48 = arith.constant 0 : index
    %c0_49 = arith.constant 0 : index
    %121 = vector.load %arg3[%120, %c0_48, %c0_49] : memref<8x8x128xbf16, #tpu.memory_space<vmem>>, vector<1x8x128xbf16>
    %122 = vector.shape_cast %121 : vector<1x8x128xbf16> to vector<8x128xbf16>
    %123 = vector.shape_cast %119 : vector<8x128xbf16> to vector<1x8x128xbf16>
    tpu.vector_store %arg3[%120, %c0_48, %c0_49], %123 {strides = array<i32>} : memref<8x8x128xbf16, #tpu.memory_space<vmem>>, vector<1x8x128xbf16>,
    %c3_i32 = arith.constant 3 : i32
    %124 = arith.index_cast %c3_i32 : i32 to index
    %c0_50 = arith.constant 0 : index
    %c0_51 = arith.constant 0 : index
    %125 = vector.load %arg1[%124, %c0_50, %c0_51] : memref<8x8x512xf32, #tpu.memory_space<vmem>>, vector<1x8x512xf32>
    %126 = vector.shape_cast %125 : vector<1x8x512xf32> to vector<8x512xf32>
    %c0_52 = arith.constant 0 : index
    %c0_53 = arith.constant 0 : index
    %127 = vector.load %arg6[%c0_52, %c0_53] : memref<8x128xf32, #tpu.memory_space<vmem>>, vector<8x128xf32>
    %128 = arith.truncf %127 : vector<8x128xf32> to vector<8x128xbf16>
    %cst_54 = arith.constant dense<0.000000e+00> : vector<8x512xf32>
    %129 = tpu.matmul %128, %3, %cst_54 {dimension_numbers = #tpu.dot_dimension_numbers<[1], [0], [0], [1], [0, 0, 1, 1], [], []>} : vector<8x128xbf16>, vector<128x512xbf16>, vector<8x512xf32> -> vector<8x512xf32>
    %130 = arith.addf %126, %129 : vector<8x512xf32>
    %131 = vector.extract_strided_slice %130 {offsets = [0, 0], sizes = [8, 128], strides = [1, 1]} : vector<8x512xf32> to vector<8x128xf32>
    %132 = arith.negf %131 : vector<8x128xf32>
    %133 = math.exp %132 : vector<8x128xf32>
    %cst_55 = arith.constant 1.000000e+00 : f32
    %134 = vector.broadcast %cst_55 : f32 to vector<8x128xf32>
    %135 = arith.addf %134, %133 : vector<8x128xf32>
    %136 = arith.divf %134, %135 : vector<8x128xf32>
    %137 = vector.extract_strided_slice %130 {offsets = [0, 128], sizes = [8, 128], strides = [1, 1]} : vector<8x512xf32> to vector<8x128xf32>
    %138 = arith.negf %137 : vector<8x128xf32>
    %139 = math.exp %138 : vector<8x128xf32>
    %cst_56 = arith.constant 1.000000e+00 : f32
    %140 = vector.broadcast %cst_56 : f32 to vector<8x128xf32>
    %141 = arith.addf %140, %139 : vector<8x128xf32>
    %142 = arith.divf %140, %141 : vector<8x128xf32>
    %143 = vector.extract_strided_slice %130 {offsets = [0, 256], sizes = [8, 128], strides = [1, 1]} : vector<8x512xf32> to vector<8x128xf32>
    %144 = math.tanh %143 : vector<8x128xf32>
    %145 = vector.extract_strided_slice %130 {offsets = [0, 384], sizes = [8, 128], strides = [1, 1]} : vector<8x512xf32> to vector<8x128xf32>
    %146 = arith.negf %145 : vector<8x128xf32>
    %147 = math.exp %146 : vector<8x128xf32>
    %cst_57 = arith.constant 1.000000e+00 : f32
    %148 = vector.broadcast %cst_57 : f32 to vector<8x128xf32>
    %149 = arith.addf %148, %147 : vector<8x128xf32>
    %150 = arith.divf %148, %149 : vector<8x128xf32>
    %c0_58 = arith.constant 0 : index
    %c0_59 = arith.constant 0 : index
    %151 = vector.load %arg7[%c0_58, %c0_59] : memref<8x128xf32, #tpu.memory_space<vmem>>, vector<8x128xf32>
    %152 = arith.mulf %142, %151 : vector<8x128xf32>
    %153 = arith.mulf %136, %144 : vector<8x128xf32>
    %154 = arith.addf %152, %153 : vector<8x128xf32>
    %155 = math.tanh %154 : vector<8x128xf32>
    %156 = arith.mulf %150, %155 : vector<8x128xf32>
    %c0_60 = arith.constant 0 : index
    %c0_61 = arith.constant 0 : index
    %157 = vector.load %arg7[%c0_60, %c0_61] : memref<8x128xf32, #tpu.memory_space<vmem>>, vector<8x128xf32>
    tpu.vector_store %arg7[%c0_60, %c0_61], %154 {strides = array<i32>} : memref<8x128xf32, #tpu.memory_space<vmem>>, vector<8x128xf32>,
    %c0_62 = arith.constant 0 : index
    %c0_63 = arith.constant 0 : index
    %158 = vector.load %arg6[%c0_62, %c0_63] : memref<8x128xf32, #tpu.memory_space<vmem>>, vector<8x128xf32>
    tpu.vector_store %arg6[%c0_62, %c0_63], %156 {strides = array<i32>} : memref<8x128xf32, #tpu.memory_space<vmem>>, vector<8x128xf32>,
    %159 = arith.truncf %156 : vector<8x128xf32> to vector<8x128xbf16>
    %160 = arith.index_cast %c3_i32 : i32 to index
    %c0_64 = arith.constant 0 : index
    %c0_65 = arith.constant 0 : index
    %161 = vector.load %arg3[%160, %c0_64, %c0_65] : memref<8x8x128xbf16, #tpu.memory_space<vmem>>, vector<1x8x128xbf16>
    %162 = vector.shape_cast %161 : vector<1x8x128xbf16> to vector<8x128xbf16>
    %163 = vector.shape_cast %159 : vector<8x128xbf16> to vector<1x8x128xbf16>
    tpu.vector_store %arg3[%160, %c0_64, %c0_65], %163 {strides = array<i32>} : memref<8x8x128xbf16, #tpu.memory_space<vmem>>, vector<1x8x128xbf16>,
    %c4_i32 = arith.constant 4 : i32
    %164 = arith.index_cast %c4_i32 : i32 to index
    %c0_66 = arith.constant 0 : index
    %c0_67 = arith.constant 0 : index
    %165 = vector.load %arg1[%164, %c0_66, %c0_67] : memref<8x8x512xf32, #tpu.memory_space<vmem>>, vector<1x8x512xf32>
    %166 = vector.shape_cast %165 : vector<1x8x512xf32> to vector<8x512xf32>
    %c0_68 = arith.constant 0 : index
    %c0_69 = arith.constant 0 : index
    %167 = vector.load %arg6[%c0_68, %c0_69] : memref<8x128xf32, #tpu.memory_space<vmem>>, vector<8x128xf32>
    %168 = arith.truncf %167 : vector<8x128xf32> to vector<8x128xbf16>
    %cst_70 = arith.constant dense<0.000000e+00> : vector<8x512xf32>
    %169 = tpu.matmul %168, %3, %cst_70 {dimension_numbers = #tpu.dot_dimension_numbers<[1], [0], [0], [1], [0, 0, 1, 1], [], []>} : vector<8x128xbf16>, vector<128x512xbf16>, vector<8x512xf32> -> vector<8x512xf32>
    %170 = arith.addf %166, %169 : vector<8x512xf32>
    %171 = vector.extract_strided_slice %170 {offsets = [0, 0], sizes = [8, 128], strides = [1, 1]} : vector<8x512xf32> to vector<8x128xf32>
    %172 = arith.negf %171 : vector<8x128xf32>
    %173 = math.exp %172 : vector<8x128xf32>
    %cst_71 = arith.constant 1.000000e+00 : f32
    %174 = vector.broadcast %cst_71 : f32 to vector<8x128xf32>
    %175 = arith.addf %174, %173 : vector<8x128xf32>
    %176 = arith.divf %174, %175 : vector<8x128xf32>
    %177 = vector.extract_strided_slice %170 {offsets = [0, 128], sizes = [8, 128], strides = [1, 1]} : vector<8x512xf32> to vector<8x128xf32>
    %178 = arith.negf %177 : vector<8x128xf32>
    %179 = math.exp %178 : vector<8x128xf32>
    %cst_72 = arith.constant 1.000000e+00 : f32
    %180 = vector.broadcast %cst_72 : f32 to vector<8x128xf32>
    %181 = arith.addf %180, %179 : vector<8x128xf32>
    %182 = arith.divf %180, %181 : vector<8x128xf32>
    %183 = vector.extract_strided_slice %170 {offsets = [0, 256], sizes = [8, 128], strides = [1, 1]} : vector<8x512xf32> to vector<8x128xf32>
    %184 = math.tanh %183 : vector<8x128xf32>
    %185 = vector.extract_strided_slice %170 {offsets = [0, 384], sizes = [8, 128], strides = [1, 1]} : vector<8x512xf32> to vector<8x128xf32>
    %186 = arith.negf %185 : vector<8x128xf32>
    %187 = math.exp %186 : vector<8x128xf32>
    %cst_73 = arith.constant 1.000000e+00 : f32
    %188 = vector.broadcast %cst_73 : f32 to vector<8x128xf32>
    %189 = arith.addf %188, %187 : vector<8x128xf32>
    %190 = arith.divf %188, %189 : vector<8x128xf32>
    %c0_74 = arith.constant 0 : index
    %c0_75 = arith.constant 0 : index
    %191 = vector.load %arg7[%c0_74, %c0_75] : memref<8x128xf32, #tpu.memory_space<vmem>>, vector<8x128xf32>
    %192 = arith.mulf %182, %191 : vector<8x128xf32>
    %193 = arith.mulf %176, %184 : vector<8x128xf32>
    %194 = arith.addf %192, %193 : vector<8x128xf32>
    %195 = math.tanh %194 : vector<8x128xf32>
    %196 = arith.mulf %190, %195 : vector<8x128xf32>
    %c0_76 = arith.constant 0 : index
    %c0_77 = arith.constant 0 : index
    %197 = vector.load %arg7[%c0_76, %c0_77] : memref<8x128xf32, #tpu.memory_space<vmem>>, vector<8x128xf32>
    tpu.vector_store %arg7[%c0_76, %c0_77], %194 {strides = array<i32>} : memref<8x128xf32, #tpu.memory_space<vmem>>, vector<8x128xf32>,
    %c0_78 = arith.constant 0 : index
    %c0_79 = arith.constant 0 : index
    %198 = vector.load %arg6[%c0_78, %c0_79] : memref<8x128xf32, #tpu.memory_space<vmem>>, vector<8x128xf32>
    tpu.vector_store %arg6[%c0_78, %c0_79], %196 {strides = array<i32>} : memref<8x128xf32, #tpu.memory_space<vmem>>, vector<8x128xf32>,
    %199 = arith.truncf %196 : vector<8x128xf32> to vector<8x128xbf16>
    %200 = arith.index_cast %c4_i32 : i32 to index
    %c0_80 = arith.constant 0 : index
    %c0_81 = arith.constant 0 : index
    %201 = vector.load %arg3[%200, %c0_80, %c0_81] : memref<8x8x128xbf16, #tpu.memory_space<vmem>>, vector<1x8x128xbf16>
    %202 = vector.shape_cast %201 : vector<1x8x128xbf16> to vector<8x128xbf16>
    %203 = vector.shape_cast %199 : vector<8x128xbf16> to vector<1x8x128xbf16>
    tpu.vector_store %arg3[%200, %c0_80, %c0_81], %203 {strides = array<i32>} : memref<8x8x128xbf16, #tpu.memory_space<vmem>>, vector<1x8x128xbf16>,
    %c5_i32 = arith.constant 5 : i32
    %204 = arith.index_cast %c5_i32 : i32 to index
    %c0_82 = arith.constant 0 : index
    %c0_83 = arith.constant 0 : index
    %205 = vector.load %arg1[%204, %c0_82, %c0_83] : memref<8x8x512xf32, #tpu.memory_space<vmem>>, vector<1x8x512xf32>
    %206 = vector.shape_cast %205 : vector<1x8x512xf32> to vector<8x512xf32>
    %c0_84 = arith.constant 0 : index
    %c0_85 = arith.constant 0 : index
    %207 = vector.load %arg6[%c0_84, %c0_85] : memref<8x128xf32, #tpu.memory_space<vmem>>, vector<8x128xf32>
    %208 = arith.truncf %207 : vector<8x128xf32> to vector<8x128xbf16>
    %cst_86 = arith.constant dense<0.000000e+00> : vector<8x512xf32>
    %209 = tpu.matmul %208, %3, %cst_86 {dimension_numbers = #tpu.dot_dimension_numbers<[1], [0], [0], [1], [0, 0, 1, 1], [], []>} : vector<8x128xbf16>, vector<128x512xbf16>, vector<8x512xf32> -> vector<8x512xf32>
    %210 = arith.addf %206, %209 : vector<8x512xf32>
    %211 = vector.extract_strided_slice %210 {offsets = [0, 0], sizes = [8, 128], strides = [1, 1]} : vector<8x512xf32> to vector<8x128xf32>
    %212 = arith.negf %211 : vector<8x128xf32>
    %213 = math.exp %212 : vector<8x128xf32>
    %cst_87 = arith.constant 1.000000e+00 : f32
    %214 = vector.broadcast %cst_87 : f32 to vector<8x128xf32>
    %215 = arith.addf %214, %213 : vector<8x128xf32>
    %216 = arith.divf %214, %215 : vector<8x128xf32>
    %217 = vector.extract_strided_slice %210 {offsets = [0, 128], sizes = [8, 128], strides = [1, 1]} : vector<8x512xf32> to vector<8x128xf32>
    %218 = arith.negf %217 : vector<8x128xf32>
    %219 = math.exp %218 : vector<8x128xf32>
    %cst_88 = arith.constant 1.000000e+00 : f32
    %220 = vector.broadcast %cst_88 : f32 to vector<8x128xf32>
    %221 = arith.addf %220, %219 : vector<8x128xf32>
    %222 = arith.divf %220, %221 : vector<8x128xf32>
    %223 = vector.extract_strided_slice %210 {offsets = [0, 256], sizes = [8, 128], strides = [1, 1]} : vector<8x512xf32> to vector<8x128xf32>
    %224 = math.tanh %223 : vector<8x128xf32>
    %225 = vector.extract_strided_slice %210 {offsets = [0, 384], sizes = [8, 128], strides = [1, 1]} : vector<8x512xf32> to vector<8x128xf32>
    %226 = arith.negf %225 : vector<8x128xf32>
    %227 = math.exp %226 : vector<8x128xf32>
    %cst_89 = arith.constant 1.000000e+00 : f32
    %228 = vector.broadcast %cst_89 : f32 to vector<8x128xf32>
    %229 = arith.addf %228, %227 : vector<8x128xf32>
    %230 = arith.divf %228, %229 : vector<8x128xf32>
    %c0_90 = arith.constant 0 : index
    %c0_91 = arith.constant 0 : index
    %231 = vector.load %arg7[%c0_90, %c0_91] : memref<8x128xf32, #tpu.memory_space<vmem>>, vector<8x128xf32>
    %232 = arith.mulf %222, %231 : vector<8x128xf32>
    %233 = arith.mulf %216, %224 : vector<8x128xf32>
    %234 = arith.addf %232, %233 : vector<8x128xf32>
    %235 = math.tanh %234 : vector<8x128xf32>
    %236 = arith.mulf %230, %235 : vector<8x128xf32>
    %c0_92 = arith.constant 0 : index
    %c0_93 = arith.constant 0 : index
    %237 = vector.load %arg7[%c0_92, %c0_93] : memref<8x128xf32, #tpu.memory_space<vmem>>, vector<8x128xf32>
    tpu.vector_store %arg7[%c0_92, %c0_93], %234 {strides = array<i32>} : memref<8x128xf32, #tpu.memory_space<vmem>>, vector<8x128xf32>,
    %c0_94 = arith.constant 0 : index
    %c0_95 = arith.constant 0 : index
    %238 = vector.load %arg6[%c0_94, %c0_95] : memref<8x128xf32, #tpu.memory_space<vmem>>, vector<8x128xf32>
    tpu.vector_store %arg6[%c0_94, %c0_95], %236 {strides = array<i32>} : memref<8x128xf32, #tpu.memory_space<vmem>>, vector<8x128xf32>,
    %239 = arith.truncf %236 : vector<8x128xf32> to vector<8x128xbf16>
    %240 = arith.index_cast %c5_i32 : i32 to index
    %c0_96 = arith.constant 0 : index
    %c0_97 = arith.constant 0 : index
    %241 = vector.load %arg3[%240, %c0_96, %c0_97] : memref<8x8x128xbf16, #tpu.memory_space<vmem>>, vector<1x8x128xbf16>
    %242 = vector.shape_cast %241 : vector<1x8x128xbf16> to vector<8x128xbf16>
    %243 = vector.shape_cast %239 : vector<8x128xbf16> to vector<1x8x128xbf16>
    tpu.vector_store %arg3[%240, %c0_96, %c0_97], %243 {strides = array<i32>} : memref<8x8x128xbf16, #tpu.memory_space<vmem>>, vector<1x8x128xbf16>,
    %c6_i32 = arith.constant 6 : i32
    %244 = arith.index_cast %c6_i32 : i32 to index
    %c0_98 = arith.constant 0 : index
    %c0_99 = arith.constant 0 : index
    %245 = vector.load %arg1[%244, %c0_98, %c0_99] : memref<8x8x512xf32, #tpu.memory_space<vmem>>, vector<1x8x512xf32>
    %246 = vector.shape_cast %245 : vector<1x8x512xf32> to vector<8x512xf32>
    %c0_100 = arith.constant 0 : index
    %c0_101 = arith.constant 0 : index
    %247 = vector.load %arg6[%c0_100, %c0_101] : memref<8x128xf32, #tpu.memory_space<vmem>>, vector<8x128xf32>
    %248 = arith.truncf %247 : vector<8x128xf32> to vector<8x128xbf16>
    %cst_102 = arith.constant dense<0.000000e+00> : vector<8x512xf32>
    %249 = tpu.matmul %248, %3, %cst_102 {dimension_numbers = #tpu.dot_dimension_numbers<[1], [0], [0], [1], [0, 0, 1, 1], [], []>} : vector<8x128xbf16>, vector<128x512xbf16>, vector<8x512xf32> -> vector<8x512xf32>
    %250 = arith.addf %246, %249 : vector<8x512xf32>
    %251 = vector.extract_strided_slice %250 {offsets = [0, 0], sizes = [8, 128], strides = [1, 1]} : vector<8x512xf32> to vector<8x128xf32>
    %252 = arith.negf %251 : vector<8x128xf32>
    %253 = math.exp %252 : vector<8x128xf32>
    %cst_103 = arith.constant 1.000000e+00 : f32
    %254 = vector.broadcast %cst_103 : f32 to vector<8x128xf32>
    %255 = arith.addf %254, %253 : vector<8x128xf32>
    %256 = arith.divf %254, %255 : vector<8x128xf32>
    %257 = vector.extract_strided_slice %250 {offsets = [0, 128], sizes = [8, 128], strides = [1, 1]} : vector<8x512xf32> to vector<8x128xf32>
    %258 = arith.negf %257 : vector<8x128xf32>
    %259 = math.exp %258 : vector<8x128xf32>
    %cst_104 = arith.constant 1.000000e+00 : f32
    %260 = vector.broadcast %cst_104 : f32 to vector<8x128xf32>
    %261 = arith.addf %260, %259 : vector<8x128xf32>
    %262 = arith.divf %260, %261 : vector<8x128xf32>
    %263 = vector.extract_strided_slice %250 {offsets = [0, 256], sizes = [8, 128], strides = [1, 1]} : vector<8x512xf32> to vector<8x128xf32>
    %264 = math.tanh %263 : vector<8x128xf32>
    %265 = vector.extract_strided_slice %250 {offsets = [0, 384], sizes = [8, 128], strides = [1, 1]} : vector<8x512xf32> to vector<8x128xf32>
    %266 = arith.negf %265 : vector<8x128xf32>
    %267 = math.exp %266 : vector<8x128xf32>
    %cst_105 = arith.constant 1.000000e+00 : f32
    %268 = vector.broadcast %cst_105 : f32 to vector<8x128xf32>
    %269 = arith.addf %268, %267 : vector<8x128xf32>
    %270 = arith.divf %268, %269 : vector<8x128xf32>
    %c0_106 = arith.constant 0 : index
    %c0_107 = arith.constant 0 : index
    %271 = vector.load %arg7[%c0_106, %c0_107] : memref<8x128xf32, #tpu.memory_space<vmem>>, vector<8x128xf32>
    %272 = arith.mulf %262, %271 : vector<8x128xf32>
    %273 = arith.mulf %256, %264 : vector<8x128xf32>
    %274 = arith.addf %272, %273 : vector<8x128xf32>
    %275 = math.tanh %274 : vector<8x128xf32>
    %276 = arith.mulf %270, %275 : vector<8x128xf32>
    %c0_108 = arith.constant 0 : index
    %c0_109 = arith.constant 0 : index
    %277 = vector.load %arg7[%c0_108, %c0_109] : memref<8x128xf32, #tpu.memory_space<vmem>>, vector<8x128xf32>
    tpu.vector_store %arg7[%c0_108, %c0_109], %274 {strides = array<i32>} : memref<8x128xf32, #tpu.memory_space<vmem>>, vector<8x128xf32>,
    %c0_110 = arith.constant 0 : index
    %c0_111 = arith.constant 0 : index
    %278 = vector.load %arg6[%c0_110, %c0_111] : memref<8x128xf32, #tpu.memory_space<vmem>>, vector<8x128xf32>
    tpu.vector_store %arg6[%c0_110, %c0_111], %276 {strides = array<i32>} : memref<8x128xf32, #tpu.memory_space<vmem>>, vector<8x128xf32>,
    %279 = arith.truncf %276 : vector<8x128xf32> to vector<8x128xbf16>
    %280 = arith.index_cast %c6_i32 : i32 to index
    %c0_112 = arith.constant 0 : index
    %c0_113 = arith.constant 0 : index
    %281 = vector.load %arg3[%280, %c0_112, %c0_113] : memref<8x8x128xbf16, #tpu.memory_space<vmem>>, vector<1x8x128xbf16>
    %282 = vector.shape_cast %281 : vector<1x8x128xbf16> to vector<8x128xbf16>
    %283 = vector.shape_cast %279 : vector<8x128xbf16> to vector<1x8x128xbf16>
    tpu.vector_store %arg3[%280, %c0_112, %c0_113], %283 {strides = array<i32>} : memref<8x8x128xbf16, #tpu.memory_space<vmem>>, vector<1x8x128xbf16>,
    %c7_i32 = arith.constant 7 : i32
    %284 = arith.index_cast %c7_i32 : i32 to index
    %c0_114 = arith.constant 0 : index
    %c0_115 = arith.constant 0 : index
    %285 = vector.load %arg1[%284, %c0_114, %c0_115] : memref<8x8x512xf32, #tpu.memory_space<vmem>>, vector<1x8x512xf32>
    %286 = vector.shape_cast %285 : vector<1x8x512xf32> to vector<8x512xf32>
    %c0_116 = arith.constant 0 : index
    %c0_117 = arith.constant 0 : index
    %287 = vector.load %arg6[%c0_116, %c0_117] : memref<8x128xf32, #tpu.memory_space<vmem>>, vector<8x128xf32>
    %288 = arith.truncf %287 : vector<8x128xf32> to vector<8x128xbf16>
    %cst_118 = arith.constant dense<0.000000e+00> : vector<8x512xf32>
    %289 = tpu.matmul %288, %3, %cst_118 {dimension_numbers = #tpu.dot_dimension_numbers<[1], [0], [0], [1], [0, 0, 1, 1], [], []>} : vector<8x128xbf16>, vector<128x512xbf16>, vector<8x512xf32> -> vector<8x512xf32>
    %290 = arith.addf %286, %289 : vector<8x512xf32>
    %291 = vector.extract_strided_slice %290 {offsets = [0, 0], sizes = [8, 128], strides = [1, 1]} : vector<8x512xf32> to vector<8x128xf32>
    %292 = arith.negf %291 : vector<8x128xf32>
    %293 = math.exp %292 : vector<8x128xf32>
    %cst_119 = arith.constant 1.000000e+00 : f32
    %294 = vector.broadcast %cst_119 : f32 to vector<8x128xf32>
    %295 = arith.addf %294, %293 : vector<8x128xf32>
    %296 = arith.divf %294, %295 : vector<8x128xf32>
    %297 = vector.extract_strided_slice %290 {offsets = [0, 128], sizes = [8, 128], strides = [1, 1]} : vector<8x512xf32> to vector<8x128xf32>
    %298 = arith.negf %297 : vector<8x128xf32>
    %299 = math.exp %298 : vector<8x128xf32>
    %cst_120 = arith.constant 1.000000e+00 : f32
    %300 = vector.broadcast %cst_120 : f32 to vector<8x128xf32>
    %301 = arith.addf %300, %299 : vector<8x128xf32>
    %302 = arith.divf %300, %301 : vector<8x128xf32>
    %303 = vector.extract_strided_slice %290 {offsets = [0, 256], sizes = [8, 128], strides = [1, 1]} : vector<8x512xf32> to vector<8x128xf32>
    %304 = math.tanh %303 : vector<8x128xf32>
    %305 = vector.extract_strided_slice %290 {offsets = [0, 384], sizes = [8, 128], strides = [1, 1]} : vector<8x512xf32> to vector<8x128xf32>
    %306 = arith.negf %305 : vector<8x128xf32>
    %307 = math.exp %306 : vector<8x128xf32>
    %cst_121 = arith.constant 1.000000e+00 : f32
    %308 = vector.broadcast %cst_121 : f32 to vector<8x128xf32>
    %309 = arith.addf %308, %307 : vector<8x128xf32>
    %310 = arith.divf %308, %309 : vector<8x128xf32>
    %c0_122 = arith.constant 0 : index
    %c0_123 = arith.constant 0 : index
    %311 = vector.load %arg7[%c0_122, %c0_123] : memref<8x128xf32, #tpu.memory_space<vmem>>, vector<8x128xf32>
    %312 = arith.mulf %302, %311 : vector<8x128xf32>
    %313 = arith.mulf %296, %304 : vector<8x128xf32>
    %314 = arith.addf %312, %313 : vector<8x128xf32>
    %315 = math.tanh %314 : vector<8x128xf32>
    %316 = arith.mulf %310, %315 : vector<8x128xf32>
    %c0_124 = arith.constant 0 : index
    %c0_125 = arith.constant 0 : index
    %317 = vector.load %arg7[%c0_124, %c0_125] : memref<8x128xf32, #tpu.memory_space<vmem>>, vector<8x128xf32>
    tpu.vector_store %arg7[%c0_124, %c0_125], %314 {strides = array<i32>} : memref<8x128xf32, #tpu.memory_space<vmem>>, vector<8x128xf32>,
    %c0_126 = arith.constant 0 : index
    %c0_127 = arith.constant 0 : index
    %318 = vector.load %arg6[%c0_126, %c0_127] : memref<8x128xf32, #tpu.memory_space<vmem>>, vector<8x128xf32>
    tpu.vector_store %arg6[%c0_126, %c0_127], %316 {strides = array<i32>} : memref<8x128xf32, #tpu.memory_space<vmem>>, vector<8x128xf32>,
    %319 = arith.truncf %316 : vector<8x128xf32> to vector<8x128xbf16>
    %320 = arith.index_cast %c7_i32 : i32 to index
    %c0_128 = arith.constant 0 : index
    %c0_129 = arith.constant 0 : index
    %321 = vector.load %arg3[%320, %c0_128, %c0_129] : memref<8x8x128xbf16, #tpu.memory_space<vmem>>, vector<1x8x128xbf16>
    %322 = vector.shape_cast %321 : vector<1x8x128xbf16> to vector<8x128xbf16>
    %323 = vector.shape_cast %319 : vector<8x128xbf16> to vector<1x8x128xbf16>
    tpu.vector_store %arg3[%320, %c0_128, %c0_129], %323 {strides = array<i32>} : memref<8x8x128xbf16, #tpu.memory_space<vmem>>, vector<1x8x128xbf16>,
    %c8_i32 = arith.constant 8 : i32
    %c1_i32_130 = arith.constant 1 : i32
    %324 = arith.cmpi eq, %arg0, %c1_i32_130 : i32
    %325 = arith.extui %324 : i1 to i32
    %c0_i32_131 = arith.constant 0 : i32
    %326 = arith.cmpi ne, %325, %c0_i32_131 : i32
    scf.if %326 {
      %c0_132 = arith.constant 0 : index
      %c0_133 = arith.constant 0 : index
      %327 = vector.load %arg6[%c0_132, %c0_133] : memref<8x128xf32, #tpu.memory_space<vmem>>, vector<8x128xf32>
      %c0_134 = arith.constant 0 : index
      %c0_135 = arith.constant 0 : index
      %328 = vector.load %arg4[%c0_134, %c0_135] : memref<8x128xf32, #tpu.memory_space<vmem>>, vector<8x128xf32>
      tpu.vector_store %arg4[%c0_134, %c0_135], %327 {strides = array<i32>} : memref<8x128xf32, #tpu.memory_space<vmem>>, vector<8x128xf32>,
      %c0_136 = arith.constant 0 : index
      %c0_137 = arith.constant 0 : index
      %329 = vector.load %arg7[%c0_136, %c0_137] : memref<8x128xf32, #tpu.memory_space<vmem>>, vector<8x128xf32>
      %c0_138 = arith.constant 0 : index
      %c0_139 = arith.constant 0 : index
      %330 = vector.load %arg5[%c0_138, %c0_139] : memref<8x128xf32, #tpu.memory_space<vmem>>, vector<8x128xf32>
      tpu.vector_store %arg5[%c0_138, %c0_139], %329 {strides = array<i32>} : memref<8x128xf32, #tpu.memory_space<vmem>>, vector<8x128xf32>,
    } else {
    }
    return
  }
  func.func @transform_0(%arg0: i32) -> (i32, i32, i32) {
    %c0_i32 = arith.constant 0 : i32
    %c0_i32_0 = arith.constant 0 : i32
    %c0_i32_1 = arith.constant 0 : i32
    return %arg0, %c0_i32, %c0_i32_0 : i32, i32, i32
  }
  func.func @transform_1(%arg0: i32) -> (i32, i32) {
    %c0_i32 = arith.constant 0 : i32
    %c0_i32_0 = arith.constant 0 : i32
    %c0_i32_1 = arith.constant 0 : i32
    return %c0_i32, %c0_i32_0 : i32, i32
  }
  func.func @transform_2(%arg0: i32) -> (i32, i32, i32) {
    %c0_i32 = arith.constant 0 : i32
    %c0_i32_0 = arith.constant 0 : i32
    %c0_i32_1 = arith.constant 0 : i32
    return %arg0, %c0_i32, %c0_i32_0 : i32, i32, i32
  }
  func.func @transform_3(%arg0: i32) -> (i32, i32) {
    %c0_i32 = arith.constant 0 : i32
    %c0_i32_0 = arith.constant 0 : i32
    %c0_i32_1 = arith.constant 0 : i32
    return %c0_i32, %c0_i32_0 : i32, i32
  }
  func.func @transform_4(%arg0: i32) -> (i32, i32) {
    %c0_i32 = arith.constant 0 : i32
    %c0_i32_0 = arith.constant 0 : i32
    %c0_i32_1 = arith.constant 0 : i32
    return %c0_i32, %c0_i32_0 : i32, i32
  }
}

</mosaic_0001>

<llo_original>
// kernel: tpu_custom_call.1
$region0: #{tpu_custom_call.1}
  #allocation0 [shape = 'u32[]', space=smem, size = 0x4, offset = 0x4, fixed_abs, tag = 'smem constant byte address 0x4 - core index']
  #allocation1 [shape = 'u32[72,128]{1,0:T(1,128)}', space=vmem, size = 0x9000, scoped, tag = 'internal scratch']
  #allocation2 [shape = 'f32[8,128]{1,0:T(8,128)}', space=vmem, size = 0x1000, scoped, tag = 'scratch operand']
  #allocation3 [shape = 'f32[8,128]{1,0:T(8,128)}', space=vmem, size = 0x1000, scoped, tag = 'scratch operand']
  %s0 = inlined_call_operand.hbm [shape: f32[16,8,512], index: 0, kind: input, shape index: {}]
  %s1 = inlined_call_operand.hbm [shape: bf16[128,512], index: 1, kind: input, shape index: {}]
  %s2 = inlined_call_operand.hbm [shape: bf16[16,8,128], index: 2, kind: output, shape index: {0}]
  %s3 = inlined_call_operand.hbm [shape: f32[8,128], index: 3, kind: output, shape index: {1}]
  %s4 = inlined_call_operand.hbm [shape: f32[8,128], index: 4, kind: output, shape index: {2}]
  %5 = xla_tuple %s2, %s3, %s4
  %s6 = sld [smem:[#allocation0]]
  $region73: #{tpu_custom_call.1} parent=0
    _
  %s8 = ssub.s32 1, %s6
  %s9 = scalar_select 0, %s8, %s6
  $region1: #{tpu_custom_call.1} parent=0
    #allocation4 [shape = 'u8[262144]{0}', space=vmem, size = 0x40000, scoped, tag = 'input window, operand 0']
    #allocation5 [shape = 's32[2]{0}', space=sflag, size = 0x8, scoped, tag = 'scoped memory for tpu_custom_call.1']
    #allocation6 [shape = 's32[2]{0}', space=sflag, size = 0x8, scoped, tag = 'scoped memory for tpu_custom_call.1']
    #allocation7 [shape = 'u8[131072]{0}', space=vmem, size = 0x20000, scoped, tag = 'input window, operand 1, single buffered']
    #allocation8 [shape = 's32[1]{0}', space=sflag, size = 0x4, scoped, tag = 'scoped memory for tpu_custom_call.1']
    #allocation9 [shape = 'u8[32768]{0}', space=vmem, size = 0x8000, scoped, tag = 'output window, operand 0']
    #allocation10 [shape = 'u8[4096]{0}', space=vmem, size = 0x1000, scoped, tag = 'output window, operand 1, single buffered']
    #allocation11 [shape = 's32[1]{0}', space=sflag, size = 0x4, scoped, tag = 'scoped memory for tpu_custom_call.1']
    #allocation12 [shape = 'u8[4096]{0}', space=vmem, size = 0x1000, scoped, tag = 'output window, operand 2, single buffered']
    %10 = vsyncpa [#allocation5], 0
    %s11 = scalar_lea.sflag [#allocation5], 1
    %12 = vsyncpa %s11, 0
    %13 = vsyncpa [#allocation8], 0
    %14 = vsyncpa [#allocation6], 0
    %s15 = scalar_lea.sflag [#allocation6], 1
    %16 = vsyncpa %s15, 0
    %17 = vsyncpa [#allocation11], 0
    loop: start=0, step=1, limit=4
    $region2: #{tpu_custom_call.1} parent=1 // loop_pre_header
      _
    $region3: #{tpu_custom_call.1} parent=1 // loop_header
      %s19 = sphi 0, %s23
      %p20 = scmp.ge.s32.totalorder %s19, 4
      %s29 = sphi 0, %s31
      %s32 = sphi 0, %s29
      %s33 = sphi 0, %s32
      %s49 = sphi 0, %s33
      %s53 = sphi 0, %s53
      %s55 = sphi 0, %s53
      %s56 = sphi 0, %s55
      %s70 = sphi 0, %s56
      %s76 = sphi 0, %s78
      %s79 = sphi 0, %s76
      %s80 = sphi 0, %s79
      %s96 = sphi 0, %s80
      %s100 = sphi 0, %s100
      %s102 = sphi 0, %s100
      %s103 = sphi 0, %s102
      %s117 = sphi 0, %s103
      %s121 = sphi 0, %s121
      %s123 = sphi 0, %s121
      %s124 = sphi 0, %s123
      %s138 = sphi 0, %s124
    $region4: #{tpu_custom_call.1} parent=1 // loop_header_branch
      %22 = sbr.rel (%p20) target = $region8
    $region5: #{tpu_custom_call.1} parent=1 // loop_body
      %s24 = ssub.s32 %s19, 1
      %s25 = ssub.s32 %s19, 2
      %s26 = sadd.s32 %s19, 1
      %s27 = ssub.s32 %s19, %s26
      %p28 = scmp.eq.s32.totalorder %s27, 0
      %s30 = sadd.s32 %s29, 1
      %s31 = scalar_select %p28, %s29, %s30
      %p34 = pneg %p28
      %p35 = scmp.eq.s32.totalorder %s19, 1
      %p36 = por %p34, %p35
      %p37 = scmp.ne.s32.totalorder %s29, %s32
      %p38 = scmp.eq.s32.totalorder %s19, 0
      %p39 = por %p37, %p38
      %p40 = scmp.ne.s32.totalorder %s29, %s32
      %p41 = scmp.eq.s32.totalorder %s24, 1
      %p42 = por %p40, %p41
      %p43 = scmp.ne.s32.totalorder %s32, %s33
      %p44 = scmp.eq.s32.totalorder %s24, 0
      %p45 = por %p43, %p44
      %p46 = scmp.ne.s32.totalorder %s32, %s33
      %p47 = scmp.eq.s32.totalorder %s25, 1
      %p48 = por %p46, %p47
      %p50 = scmp.ne.s32.totalorder %s33, %s49
      %p51 = scmp.eq.s32.totalorder %s25, 0
      %p52 = por %p50, %p51
      %s54 = sadd.s32 %s53, 1
      %p57 = scmp.eq.s32.totalorder %s19, 1
      %p58 = scmp.ne.s32.totalorder %s53, %s55
      %p59 = scmp.eq.s32.totalorder %s19, 0
      %p60 = por %p58, %p59
      %p61 = scmp.ne.s32.totalorder %s53, %s55
      %p62 = scmp.eq.s32.totalorder %s24, 1
      %p63 = por %p61, %p62
      %p64 = scmp.ne.s32.totalorder %s55, %s56
      %p65 = scmp.eq.s32.totalorder %s24, 0
      %p66 = por %p64, %p65
      %p67 = scmp.ne.s32.totalorder %s55, %s56
      %p68 = scmp.eq.s32.totalorder %s25, 1
      %p69 = por %p67, %p68
      %p71 = scmp.ne.s32.totalorder %s56, %s70
      %p72 = scmp.eq.s32.totalorder %s25, 0
      %p73 = por %p71, %p72
      %s74 = ssub.s32 %s19, %s26
      %p75 = scmp.eq.s32.totalorder %s74, 0
      %s77 = sadd.s32 %s76, 1
      %s78 = scalar_select %p75, %s76, %s77
      %p81 = pneg %p75
      %p82 = scmp.eq.s32.totalorder %s19, 1
      %p83 = por %p81, %p82
      %p84 = scmp.ne.s32.totalorder %s76, %s79
      %p85 = scmp.eq.s32.totalorder %s19, 0
      %p86 = por %p84, %p85
      %p87 = scmp.ne.s32.totalorder %s76, %s79
      %p88 = scmp.eq.s32.totalorder %s24, 1
      %p89 = por %p87, %p88
      %p90 = scmp.ne.s32.totalorder %s79, %s80
      %p91 = scmp.eq.s32.totalorder %s24, 0
      %p92 = por %p90, %p91
      %p93 = scmp.ne.s32.totalorder %s79, %s80
      %p94 = scmp.eq.s32.totalorder %s25, 1
      %p95 = por %p93, %p94
      %p97 = scmp.ne.s32.totalorder %s80, %s96
      %p98 = scmp.eq.s32.totalorder %s25, 0
      %p99 = por %p97, %p98
      %s101 = sadd.s32 %s100, 1
      %p104 = scmp.eq.s32.totalorder %s19, 1
      %p105 = scmp.ne.s32.totalorder %s100, %s102
      %p106 = scmp.eq.s32.totalorder %s19, 0
      %p107 = por %p105, %p106
      %p108 = scmp.ne.s32.totalorder %s100, %s102
      %p109 = scmp.eq.s32.totalorder %s24, 1
      %p110 = por %p108, %p109
      %p111 = scmp.ne.s32.totalorder %s102, %s103
      %p112 = scmp.eq.s32.totalorder %s24, 0
      %p113 = por %p111, %p112
      %p114 = scmp.ne.s32.totalorder %s102, %s103
      %p115 = scmp.eq.s32.totalorder %s25, 1
      %p116 = por %p114, %p115
      %p118 = scmp.ne.s32.totalorder %s103, %s117
      %p119 = scmp.eq.s32.totalorder %s25, 0
      %p120 = por %p118, %p119
      %s122 = sadd.s32 %s121, 1
      %p125 = scmp.eq.s32.totalorder %s19, 1
      %p126 = scmp.ne.s32.totalorder %s121, %s123
      %p127 = scmp.eq.s32.totalorder %s19, 0
      %p128 = por %p126, %p127
      %p129 = scmp.ne.s32.totalorder %s121, %s123
      %p130 = scmp.eq.s32.totalorder %s24, 1
      %p131 = por %p129, %p130
      %p132 = scmp.ne.s32.totalorder %s123, %s124
      %p133 = scmp.eq.s32.totalorder %s24, 0
      %p134 = por %p132, %p133
      %p135 = scmp.ne.s32.totalorder %s123, %s124
      %p136 = scmp.eq.s32.totalorder %s25, 1
      %p137 = por %p135, %p136
      %p139 = scmp.ne.s32.totalorder %s124, %s138
      %p140 = scmp.eq.s32.totalorder %s25, 0
      %p141 = por %p139, %p140
      %p142 = scmp.le.s32.totalorder 1, %s19
      %p143 = scmp.lt.s32.totalorder %s19, 3
      %p144 = pnand %p142, %p143
      %p145 = pneg %p144
      // Predicated region
      $region9: #{tpu_custom_call.1} parent=5 // pred_check
        _
      $region10: #{tpu_custom_call.1} parent=5 // pred_check_branch
        %147 = sbr.rel (%p144) target = $region12
      $region11: #{tpu_custom_call.1} parent=5 // pred_region
        %s148 = ssub.s32 %s19, 1
        // Predicated region
        $region13: #{tpu_custom_call.1} parent=11 // pred_check
          %p149 = pneg %p66
        $region14: #{tpu_custom_call.1} parent=11 // pred_check_branch
          %151 = sbr.rel (%p149) target = $region16
        $region15: #{tpu_custom_call.1} parent=11 // pred_region
          %153 = vsyncadd [#allocation8], 0
          %s154 = sshll.u32 %s1, 4
          %s155 = int_to_ptr.hbm [resolvable:$true] %s154
          %s156 = sshll.u32 [#allocation7], 4
          %s157 = int_to_ptr.vmem [resolvable:$true] %s156
          %162 = dma.hbm_to_vmem [thread:$0]  %s155, 4096, %s157, [#allocation8], 256, 256, 16
        $region16: #{tpu_custom_call.1} parent=11 // pred_fallthru
          _
      $region12: #{tpu_custom_call.1} parent=5 // pred_fallthru
        _
      %p163 = scmp.lt.s32.totalorder %s19, 2
      // Predicated region
      $region17: #{tpu_custom_call.1} parent=5 // pred_check
        %p164 = pneg %p163
      $region18: #{tpu_custom_call.1} parent=5 // pred_check_branch
        %166 = sbr.rel (%p164) target = $region20
      $region19: #{tpu_custom_call.1} parent=5 // pred_region
        // Predicated region
        $region21: #{tpu_custom_call.1} parent=19 // pred_check
          %p167 = pneg %p39
        $region22: #{tpu_custom_call.1} parent=19 // pred_check_branch
          %169 = sbr.rel (%p167) target = $region24
        $region23: #{tpu_custom_call.1} parent=19 // pred_region
          %s170 = sand.u32 %s29, 1
          %s171 = scalar_lea.sflag [#allocation5], %s170
          %s172 = sand.u32 %s29, 1
          %s173 = smul.addr %s172, 256
          %s174 = scalar_lea.vmem [#allocation4], %s173
          %s175 = smul.u32 8, %s19
          %177 = vsyncadd %s171, 0
          %s178 = smul.addr %s175, 4
          %s179 = smul.addr %s178, 8
          %s180 = scalar_lea.hbm %s0, %s179
          %s181 = sshll.u32 %s180, 4
          %s182 = int_to_ptr.hbm [resolvable:$true] %s181
          %s183 = sshll.u32 %s174, 4
          %s184 = int_to_ptr.vmem [resolvable:$true] %s183
          %189 = dma.hbm_to_vmem [thread:$0]  %s182, 4096, %s184, %s171, 512, 512, 32
        $region24: #{tpu_custom_call.1} parent=19 // pred_fallthru
          _
      $region20: #{tpu_custom_call.1} parent=5 // pred_fallthru
        _
      %p190 = scmp.le.s32.totalorder 1, %s19
      %p191 = scmp.lt.s32.totalorder %s19, 3
      %p192 = pnand %p190, %p191
      %p193 = pneg %p192
      // Predicated region
      $region25: #{tpu_custom_call.1} parent=5 // pred_check
        _
      $region26: #{tpu_custom_call.1} parent=5 // pred_check_branch
        %195 = sbr.rel (%p192) target = $region28
      $region27: #{tpu_custom_call.1} parent=5 // pred_region
        %s196 = ssub.s32 %s19, 1
        %s197 = sand.u32 %s32, 1
        %s198 = scalar_lea.sflag [#allocation5], %s197
        %s199 = sand.u32 %s32, 1
        %s200 = smul.addr %s199, 256
        %s201 = scalar_lea.vmem [#allocation4], %s200
        // Predicated region
        $region29: #{tpu_custom_call.1} parent=27 // pred_check
          %p202 = pneg %p45
        $region30: #{tpu_custom_call.1} parent=27 // pred_check_branch
          %204 = sbr.rel (%p202) target = $region32
        $region31: #{tpu_custom_call.1} parent=27 // pred_region
          %206 = dma.done %s198, 4096
        $region32: #{tpu_custom_call.1} parent=27 // pred_fallthru
          _
        // Predicated region
        $region33: #{tpu_custom_call.1} parent=27 // pred_check
          %p207 = pneg %p66
        $region34: #{tpu_custom_call.1} parent=27 // pred_check_branch
          %209 = sbr.rel (%p207) target = $region36
        $region35: #{tpu_custom_call.1} parent=27 // pred_region
          %211 = dma.done [#allocation8], 4096
        $region36: #{tpu_custom_call.1} parent=27 // pred_fallthru
          _
        %s212 = sand.u32 %s32, 1
        %s213 = scalar_lea.sflag [#allocation5], %s212
        %s214 = sand.u32 %s32, 1
        %s215 = smul.addr %s214, 256
        %s216 = scalar_lea.vmem [#allocation4], %s215
        %p217 = pneg %p45
        %p218 = pneg %p42
        %p219 = pneg %p66
        %p220 = pneg %p63
        %p221 = pneg %p92
        %p222 = pneg %p89
        %s223 = sand.u32 %s79, 1
        %s224 = scalar_lea.sflag [#allocation6], %s223
        %s225 = sand.u32 %s79, 1
        %s226 = smul.addr %s225, 32
        %s227 = scalar_lea.vmem [#allocation9], %s226
        %p228 = pneg %p113
        %p229 = pneg %p110
        %p230 = pneg %p134
        %p231 = pneg %p131
        %s232 = smul.u32 8, %s24
        %s233 = smul.u32 8, %s24
        %p234 = scmp.eq.s32.totalorder %s24, 0
        // Predicated region
        $region37: #{tpu_custom_call.1} parent=27 // pred_check
          %p235 = pneg %p234
        $region38: #{tpu_custom_call.1} parent=27 // pred_check_branch
          %237 = sbr.rel (%p235) target = $region40
        $region39: #{tpu_custom_call.1} parent=27 // pred_region
          %238 = vst [vmem:[#allocation2] sm:$0xff] 0.0
          %239 = vst [vmem:[#allocation3] sm:$0xff] 0.0
        $region40: #{tpu_custom_call.1} parent=27 // pred_fallthru
          _
        %v240 = vld [vmem:[#allocation7] sm:$0xff]
        %v241 = vld [vmem:[#allocation7 + $0x8] sm:$0xff]
        %v242 = vld [vmem:[#allocation7 + $0x10] sm:$0xff]
        %v243 = vld [vmem:[#allocation7 + $0x18] sm:$0xff]
        %v244 = vld [vmem:[#allocation7 + $0x20] sm:$0xff]
        %v245 = vld [vmem:[#allocation7 + $0x28] sm:$0xff]
        %v246 = vld [vmem:[#allocation7 + $0x30] sm:$0xff]
        %v247 = vld [vmem:[#allocation7 + $0x38] sm:$0xff]
        %v248 = vld [vmem:[#allocation7 + $0x40] sm:$0xff]
        %v249 = vld [vmem:[#allocation7 + $0x48] sm:$0xff]
        %v250 = vld [vmem:[#allocation7 + $0x50] sm:$0xff]
        %v251 = vld [vmem:[#allocation7 + $0x58] sm:$0xff]
        %v252 = vld [vmem:[#allocation7 + $0x60] sm:$0xff]
        %v253 = vld [vmem:[#allocation7 + $0x68] sm:$0xff]
        %v254 = vld [vmem:[#allocation7 + $0x70] sm:$0xff]
        %v255 = vld [vmem:[#allocation7 + $0x78] sm:$0xff]
        %v256 = vld [vmem:[#allocation7 + $0x80] sm:$0xff]
        %v257 = vld [vmem:[#allocation7 + $0x88] sm:$0xff]
        %v258 = vld [vmem:[#allocation7 + $0x90] sm:$0xff]
        %v259 = vld [vmem:[#allocation7 + $0x98] sm:$0xff]
        %v260 = vld [vmem:[#allocation7 + $0xa0] sm:$0xff]
        %v261 = vld [vmem:[#allocation7 + $0xa8] sm:$0xff]
        %v262 = vld [vmem:[#allocation7 + $0xb0] sm:$0xff]
        %v263 = vld [vmem:[#allocation7 + $0xb8] sm:$0xff]
        %v264 = vld [vmem:[#allocation7 + $0xc0] sm:$0xff]
        %v265 = vld [vmem:[#allocation7 + $0xc8] sm:$0xff]
        %v266 = vld [vmem:[#allocation7 + $0xd0] sm:$0xff]
        %v267 = vld [vmem:[#allocation7 + $0xd8] sm:$0xff]
        %v268 = vld [vmem:[#allocation7 + $0xe0] sm:$0xff]
        %v269 = vld [vmem:[#allocation7 + $0xe8] sm:$0xff]
        %v270 = vld [vmem:[#allocation7 + $0xf0] sm:$0xff]
        %v271 = vld [vmem:[#allocation7 + $0xf8] sm:$0xff]
        %v272 = vld [vmem:[%s201] sm:$0xff]
        %v273 = vld [vmem:[%s201 + $0x8] sm:$0xff]
        %v274 = vld [vmem:[%s201 + $0x10] sm:$0xff]
        %v275 = vld [vmem:[%s201 + $0x18] sm:$0xff]
        %v276 = vld [vmem:[#allocation2] sm:$0xff]
        %v277 = vpack.c.bf16 %v276, %v276
        %v310 = vunpack.c.l.b16 %v240
        %v311 = vunpack.c.h.b16 %v240
        %v312 = vunpack.c.l.b16 %v241
        %v313 = vunpack.c.h.b16 %v241
        %v314 = vunpack.c.l.b16 %v242
        %v315 = vunpack.c.h.b16 %v242
        %v316 = vunpack.c.l.b16 %v243
        %v317 = vunpack.c.h.b16 %v243
        %v318 = vunpack.c.l.b16 %v244
        %v319 = vunpack.c.h.b16 %v244
        %v320 = vunpack.c.l.b16 %v245
        %v321 = vunpack.c.h.b16 %v245
        %v322 = vunpack.c.l.b16 %v246
        %v323 = vunpack.c.h.b16 %v246
        %v324 = vunpack.c.l.b16 %v247
        %v325 = vunpack.c.h.b16 %v247
        %v326 = vunpack.c.l.b16 %v248
        %v327 = vunpack.c.h.b16 %v248
        %v328 = vunpack.c.l.b16 %v249
        %v329 = vunpack.c.h.b16 %v249
        %v330 = vunpack.c.l.b16 %v250
        %v331 = vunpack.c.h.b16 %v250
        %v332 = vunpack.c.l.b16 %v251
        %v333 = vunpack.c.h.b16 %v251
        %v334 = vunpack.c.l.b16 %v252
        %v335 = vunpack.c.h.b16 %v252
        %v336 = vunpack.c.l.b16 %v253
        %v337 = vunpack.c.h.b16 %v253
        %v338 = vunpack.c.l.b16 %v254
        %v339 = vunpack.c.h.b16 %v254
        %v340 = vunpack.c.l.b16 %v255
        %v341 = vunpack.c.h.b16 %v255
        %v342 = vunpack.c.l.b16 %v256
        %v343 = vunpack.c.h.b16 %v256
        %v344 = vunpack.c.l.b16 %v257
        %v345 = vunpack.c.h.b16 %v257
        %v346 = vunpack.c.l.b16 %v258
        %v347 = vunpack.c.h.b16 %v258
        %v348 = vunpack.c.l.b16 %v259
        %v349 = vunpack.c.h.b16 %v259
        %v350 = vunpack.c.l.b16 %v260
        %v351 = vunpack.c.h.b16 %v260
        %v352 = vunpack.c.l.b16 %v261
        %v353 = vunpack.c.h.b16 %v261
        %v354 = vunpack.c.l.b16 %v262
        %v355 = vunpack.c.h.b16 %v262
        %v356 = vunpack.c.l.b16 %v263
        %v357 = vunpack.c.h.b16 %v263
        %v358 = vunpack.c.l.b16 %v264
        %v359 = vunpack.c.h.b16 %v264
        %v360 = vunpack.c.l.b16 %v265
        %v361 = vunpack.c.h.b16 %v265
        %v362 = vunpack.c.l.b16 %v266
        %v363 = vunpack.c.h.b16 %v266
        %v364 = vunpack.c.l.b16 %v267
        %v365 = vunpack.c.h.b16 %v267
        %v366 = vunpack.c.l.b16 %v268
        %v367 = vunpack.c.h.b16 %v268
        %v368 = vunpack.c.l.b16 %v269
        %v369 = vunpack.c.h.b16 %v269
        %v370 = vunpack.c.l.b16 %v270
        %v371 = vunpack.c.h.b16 %v270
        %v372 = vunpack.c.l.b16 %v271
        %v373 = vunpack.c.h.b16 %v271
        %v374 = vpack.c.b16 %v314, %v310
        %v375 = vpack.c.b16 %v315, %v311
        %v376 = vpack.c.b16 %v316, %v312
        %v377 = vpack.c.b16 %v317, %v313
        %v378 = vpack.c.b16 %v322, %v318
        %v379 = vpack.c.b16 %v323, %v319
        %v380 = vpack.c.b16 %v324, %v320
        %v381 = vpack.c.b16 %v325, %v321
        %v382 = vpack.c.b16 %v330, %v326
        %v383 = vpack.c.b16 %v331, %v327
        %v384 = vpack.c.b16 %v332, %v328
        %v385 = vpack.c.b16 %v333, %v329
        %v386 = vpack.c.b16 %v338, %v334
        %v387 = vpack.c.b16 %v339, %v335
        %v388 = vpack.c.b16 %v340, %v336
        %v389 = vpack.c.b16 %v341, %v337
        %v390 = vpack.c.b16 %v346, %v342
        %v391 = vpack.c.b16 %v347, %v343
        %v392 = vpack.c.b16 %v348, %v344
        %v393 = vpack.c.b16 %v349, %v345
        %v394 = vpack.c.b16 %v354, %v350
        %v395 = vpack.c.b16 %v355, %v351
        %v396 = vpack.c.b16 %v356, %v352
        %v397 = vpack.c.b16 %v357, %v353
        %v398 = vpack.c.b16 %v362, %v358
        %v399 = vpack.c.b16 %v363, %v359
        %v400 = vpack.c.b16 %v364, %v360
        %v401 = vpack.c.b16 %v365, %v361
        %v402 = vpack.c.b16 %v370, %v366
        %v403 = vpack.c.b16 %v371, %v367
        %v404 = vpack.c.b16 %v372, %v368
        %v405 = vpack.c.b16 %v373, %v369
        %438 = vmatpush.bf16.msra.mxu0 %v402
        %439 = vmatpush.bf16.msra.mxu0 %v398
        %440 = vmatpush.bf16.msra.mxu0 %v394
        %441 = vmatpush.bf16.msra.mxu0 %v390
        %442 = vmatpush.bf16.msra.mxu0 %v386
        %443 = vmatpush.bf16.msra.mxu0 %v382
        %444 = vmatpush.bf16.msra.mxu0 %v378
        %445 = vmatpush.bf16.msra.mxu0 %v374
        %446 = vmatmul.bf16.gmra.mxu0 %v277
        %v447 = vpop.f32.mrf.mxu0
        %v448 = vadd.f32 0.0, %v447
        %v449 = vpop.f32.mrf.mxu0
        %450 = vdwg.mxu0
        %451 = vmatpush.bf16.msra.mxu0 %v403
        %452 = vmatpush.bf16.msra.mxu0 %v399
        %453 = vmatpush.bf16.msra.mxu0 %v395
        %454 = vmatpush.bf16.msra.mxu0 %v391
        %455 = vmatpush.bf16.msra.mxu0 %v387
        %456 = vmatpush.bf16.msra.mxu0 %v383
        %457 = vmatpush.bf16.msra.mxu0 %v379
        %458 = vmatpush.bf16.msra.mxu0 %v375
        %459 = vmatmul.bf16.gmra.mxu0 %v277
        %v460 = vpop.f32.mrf.mxu0
        %v461 = vadd.f32 0.0, %v460
        %v462 = vpop.f32.mrf.mxu0
        %463 = vdwg.mxu0
        %464 = vmatpush.bf16.msra.mxu0 %v404
        %465 = vmatpush.bf16.msra.mxu0 %v400
        %466 = vmatpush.bf16.msra.mxu0 %v396
        %467 = vmatpush.bf16.msra.mxu0 %v392
        %468 = vmatpush.bf16.msra.mxu0 %v388
        %469 = vmatpush.bf16.msra.mxu0 %v384
        %470 = vmatpush.bf16.msra.mxu0 %v380
        %471 = vmatpush.bf16.msra.mxu0 %v376
        %472 = vmatmul.bf16.gmra.mxu0 %v277
        %v473 = vpop.f32.mrf.mxu0
        %v474 = vadd.f32 0.0, %v473
        %v475 = vpop.f32.mrf.mxu0
        %476 = vdwg.mxu0
        %477 = vmatpush.bf16.msra.mxu0 %v405
        %478 = vmatpush.bf16.msra.mxu0 %v401
        %479 = vmatpush.bf16.msra.mxu0 %v397
        %480 = vmatpush.bf16.msra.mxu0 %v393
        %481 = vmatpush.bf16.msra.mxu0 %v389
        %482 = vmatpush.bf16.msra.mxu0 %v385
        %483 = vmatpush.bf16.msra.mxu0 %v381
        %484 = vmatpush.bf16.msra.mxu0 %v377
        %485 = vmatmul.bf16.gmra.mxu0 %v277
        %v486 = vpop.f32.mrf.mxu0
        %v487 = vadd.f32 0.0, %v486
        %v488 = vpop.f32.mrf.mxu0
        %489 = vdwg.mxu0
        %v490 = vadd.f32 %v272, %v448
        %v491 = vadd.f32 %v273, %v461
        %v492 = vadd.f32 %v274, %v474
        %v493 = vadd.f32 %v275, %v487
        %v494 = vxor.u32 %v490, 2147483648
        %v495 = vmul.f32 %v494, 1.442695
        %v496 = vpow.pop %v495
        %v497 = vadd.f32 %v496, 1.0
        %v498 = vrcp.pop %v497
        %v499 = vmul.f32 %v497, %v498
        %v500 = vsub.f32 1.0, %v499
        %v501 = vmul.f32 %v498, %v500
        %v502 = vadd.f32 %v498, %v501
        %vm503 = vweird.f32 %v497
        %vm504 = vweird.f32 %v498
        %vm505 = vmor %vm503, %vm504
        %v506 = vsel %vm505, %v498, %v502
        %v507 = vand.u32 2147483647, %v497
        %vm508 = vcmp.eq.f32.partialorder %v507, 8.507059e+37
        %v509 = vand.u32 %v497, 2147483648
        %v510 = vor.u32 1.1754944e-38, %v509
        %v511 = vsel %vm508, %v510, %v506
        %v512 = vmul.f32 1.0, %v511
        %v513 = vxor.u32 %v491, 2147483648
        %v514 = vmul.f32 %v513, 1.442695
        %v515 = vpow.pop %v514
        %v516 = vadd.f32 %v515, 1.0
        %v517 = vrcp.pop %v516
        %v518 = vmul.f32 %v516, %v517
        %v519 = vsub.f32 1.0, %v518
        %v520 = vmul.f32 %v517, %v519
        %v521 = vadd.f32 %v517, %v520
        %vm522 = vweird.f32 %v516
        %vm523 = vweird.f32 %v517
        %vm524 = vmor %vm522, %vm523
        %v525 = vsel %vm524, %v517, %v521
        %v526 = vand.u32 2147483647, %v516
        %vm527 = vcmp.eq.f32.partialorder %v526, 8.507059e+37
        %v528 = vand.u32 %v516, 2147483648
        %v529 = vor.u32 1.1754944e-38, %v528
        %v530 = vsel %vm527, %v529, %v525
        %v531 = vmul.f32 1.0, %v530
        %v532 = vtanh.pop %v492
        %v533 = vxor.u32 %v493, 2147483648
        %v534 = vmul.f32 %v533, 1.442695
        %v535 = vpow.pop %v534
        %v536 = vadd.f32 %v535, 1.0
        %v537 = vrcp.pop %v536
        %v538 = vmul.f32 %v536, %v537
        %v539 = vsub.f32 1.0, %v538
        %v540 = vmul.f32 %v537, %v539
        %v541 = vadd.f32 %v537, %v540
        %vm542 = vweird.f32 %v536
        %vm543 = vweird.f32 %v537
        %vm544 = vmor %vm542, %vm543
        %v545 = vsel %vm544, %v537, %v541
        %v546 = vand.u32 2147483647, %v536
        %vm547 = vcmp.eq.f32.partialorder %v546, 8.507059e+37
        %v548 = vand.u32 %v536, 2147483648
        %v549 = vor.u32 1.1754944e-38, %v548
        %v550 = vsel %vm547, %v549, %v545
        %v551 = vmul.f32 1.0, %v550
        %v552 = vld [vmem:[#allocation3] sm:$0xff]
        %v553 = vmul.f32 %v531, %v552
        %v554 = vmul.f32 %v512, %v532
        %v555 = vadd.f32 %v553, %v554
        %v556 = vtanh.pop %v555
        %v557 = vmul.f32 %v551, %v556
        %558 = vst [vmem:[#allocation3] sm:$0xff] %v555
        %559 = vst [vmem:[#allocation2] sm:$0xff] %v557
        %v560 = vpack.c.bf16 %v557, %v557
        %561 = vst [vmem:[%s227] sm:$0xf] %v560
        %s562 = scalar_lea.vmem %s201, 32 [#allocation4]
        %v563 = vld [vmem:[%s562] sm:$0xff]
        %v564 = vld [vmem:[%s562 + $0x8] sm:$0xff]
        %v565 = vld [vmem:[%s562 + $0x10] sm:$0xff]
        %v566 = vld [vmem:[%s562 + $0x18] sm:$0xff]
        %v567 = vld [vmem:[#allocation2] sm:$0xff]
        %v568 = vpack.c.bf16 %v567, %v567
        %569 = vmatpush.bf16.msra.mxu0 %v402
        %570 = vmatpush.bf16.msra.mxu0 %v398
        %571 = vmatpush.bf16.msra.mxu0 %v394
        %572 = vmatpush.bf16.msra.mxu0 %v390
        %573 = vmatpush.bf16.msra.mxu0 %v386
        %574 = vmatpush.bf16.msra.mxu0 %v382
        %575 = vmatpush.bf16.msra.mxu0 %v378
        %576 = vmatpush.bf16.msra.mxu0 %v374
        %577 = vmatmul.bf16.gmra.mxu0 %v568
        %v578 = vpop.f32.mrf.mxu0
        %v579 = vadd.f32 0.0, %v578
        %v580 = vpop.f32.mrf.mxu0
        %581 = vdwg.mxu0
        %582 = vmatpush.bf16.msra.mxu0 %v403
        %583 = vmatpush.bf16.msra.mxu0 %v399
        %584 = vmatpush.bf16.msra.mxu0 %v395
        %585 = vmatpush.bf16.msra.mxu0 %v391
        %586 = vmatpush.bf16.msra.mxu0 %v387
        %587 = vmatpush.bf16.msra.mxu0 %v383
        %588 = vmatpush.bf16.msra.mxu0 %v379
        %589 = vmatpush.bf16.msra.mxu0 %v375
        %590 = vmatmul.bf16.gmra.mxu0 %v568
        %v591 = vpop.f32.mrf.mxu0
        %v592 = vadd.f32 0.0, %v591
        %v593 = vpop.f32.mrf.mxu0
        %594 = vdwg.mxu0
        %595 = vmatpush.bf16.msra.mxu0 %v404
        %596 = vmatpush.bf16.msra.mxu0 %v400
        %597 = vmatpush.bf16.msra.mxu0 %v396
        %598 = vmatpush.bf16.msra.mxu0 %v392
        %599 = vmatpush.bf16.msra.mxu0 %v388
        %600 = vmatpush.bf16.msra.mxu0 %v384
        %601 = vmatpush.bf16.msra.mxu0 %v380
        %602 = vmatpush.bf16.msra.mxu0 %v376
        %603 = vmatmul.bf16.gmra.mxu0 %v568
        %v604 = vpop.f32.mrf.mxu0
        %v605 = vadd.f32 0.0, %v604
        %v606 = vpop.f32.mrf.mxu0
        %607 = vdwg.mxu0
        %608 = vmatpush.bf16.msra.mxu0 %v405
        %609 = vmatpush.bf16.msra.mxu0 %v401
        %610 = vmatpush.bf16.msra.mxu0 %v397
        %611 = vmatpush.bf16.msra.mxu0 %v393
        %612 = vmatpush.bf16.msra.mxu0 %v389
        %613 = vmatpush.bf16.msra.mxu0 %v385
        %614 = vmatpush.bf16.msra.mxu0 %v381
        %615 = vmatpush.bf16.msra.mxu0 %v377
        %616 = vmatmul.bf16.gmra.mxu0 %v568
        %v617 = vpop.f32.mrf.mxu0
        %v618 = vadd.f32 0.0, %v617
        %v619 = vpop.f32.mrf.mxu0
        %620 = vdwg.mxu0
        %v621 = vadd.f32 %v563, %v579
        %v622 = vadd.f32 %v564, %v592
        %v623 = vadd.f32 %v565, %v605
        %v624 = vadd.f32 %v566, %v618
        %v625 = vxor.u32 %v621, 2147483648
        %v626 = vmul.f32 %v625, 1.442695
        %v627 = vpow.pop %v626
        %v628 = vadd.f32 %v627, 1.0
        %v629 = vrcp.pop %v628
        %v630 = vmul.f32 %v628, %v629
        %v631 = vsub.f32 1.0, %v630
        %v632 = vmul.f32 %v629, %v631
        %v633 = vadd.f32 %v629, %v632
        %vm634 = vweird.f32 %v628
        %vm635 = vweird.f32 %v629
        %vm636 = vmor %vm634, %vm635
        %v637 = vsel %vm636, %v629, %v633
        %v638 = vand.u32 2147483647, %v628
        %vm639 = vcmp.eq.f32.partialorder %v638, 8.507059e+37
        %v640 = vand.u32 %v628, 2147483648
        %v641 = vor.u32 1.1754944e-38, %v640
        %v642 = vsel %vm639, %v641, %v637
        %v643 = vmul.f32 1.0, %v642
        %v644 = vxor.u32 %v622, 2147483648
        %v645 = vmul.f32 %v644, 1.442695
        %v646 = vpow.pop %v645
        %v647 = vadd.f32 %v646, 1.0
        %v648 = vrcp.pop %v647
        %v649 = vmul.f32 %v647, %v648
        %v650 = vsub.f32 1.0, %v649
        %v651 = vmul.f32 %v648, %v650
        %v652 = vadd.f32 %v648, %v651
        %vm653 = vweird.f32 %v647
        %vm654 = vweird.f32 %v648
        %vm655 = vmor %vm653, %vm654
        %v656 = vsel %vm655, %v648, %v652
        %v657 = vand.u32 2147483647, %v647
        %vm658 = vcmp.eq.f32.partialorder %v657, 8.507059e+37
        %v659 = vand.u32 %v647, 2147483648
        %v660 = vor.u32 1.1754944e-38, %v659
        %v661 = vsel %vm658, %v660, %v656
        %v662 = vmul.f32 1.0, %v661
        %v663 = vtanh.pop %v623
        %v664 = vxor.u32 %v624, 2147483648
        %v665 = vmul.f32 %v664, 1.442695
        %v666 = vpow.pop %v665
        %v667 = vadd.f32 %v666, 1.0
        %v668 = vrcp.pop %v667
        %v669 = vmul.f32 %v667, %v668
        %v670 = vsub.f32 1.0, %v669
        %v671 = vmul.f32 %v668, %v670
        %v672 = vadd.f32 %v668, %v671
        %vm673 = vweird.f32 %v667
        %vm674 = vweird.f32 %v668
        %vm675 = vmor %vm673, %vm674
        %v676 = vsel %vm675, %v668, %v672
        %v677 = vand.u32 2147483647, %v667
        %vm678 = vcmp.eq.f32.partialorder %v677, 8.507059e+37
        %v679 = vand.u32 %v667, 2147483648
        %v680 = vor.u32 1.1754944e-38, %v679
        %v681 = vsel %vm678, %v680, %v676
        %v682 = vmul.f32 1.0, %v681
        %v683 = vld [vmem:[#allocation3] sm:$0xff]
        %v684 = vmul.f32 %v662, %v683
        %v685 = vmul.f32 %v643, %v663
        %v686 = vadd.f32 %v684, %v685
        %v687 = vtanh.pop %v686
        %v688 = vmul.f32 %v682, %v687
        %689 = vst [vmem:[#allocation3] sm:$0xff] %v686
        %690 = vst [vmem:[#allocation2] sm:$0xff] %v688
        %v691 = vpack.c.bf16 %v688, %v688
        %s692 = scalar_lea.vmem %s227, 4 [#allocation9]
        %693 = vst [vmem:[%s692] sm:$0xf] %v691
        %s694 = scalar_lea.vmem %s201, 64 [#allocation4]
        %v695 = vld [vmem:[%s694] sm:$0xff]
        %v696 = vld [vmem:[%s694 + $0x8] sm:$0xff]
        %v697 = vld [vmem:[%s694 + $0x10] sm:$0xff]
        %v698 = vld [vmem:[%s694 + $0x18] sm:$0xff]
        %v699 = vld [vmem:[#allocation2] sm:$0xff]
        %v700 = vpack.c.bf16 %v699, %v699
        %701 = vmatpush.bf16.msra.mxu0 %v402
        %702 = vmatpush.bf16.msra.mxu0 %v398
        %703 = vmatpush.bf16.msra.mxu0 %v394
        %704 = vmatpush.bf16.msra.mxu0 %v390
        %705 = vmatpush.bf16.msra.mxu0 %v386
        %706 = vmatpush.bf16.msra.mxu0 %v382
        %707 = vmatpush.bf16.msra.mxu0 %v378
        %708 = vmatpush.bf16.msra.mxu0 %v374
        %709 = vmatmul.bf16.gmra.mxu0 %v700
        %v710 = vpop.f32.mrf.mxu0
        %v711 = vadd.f32 0.0, %v710
        %v712 = vpop.f32.mrf.mxu0
        %713 = vdwg.mxu0
        %714 = vmatpush.bf16.msra.mxu0 %v403
        %715 = vmatpush.bf16.msra.mxu0 %v399
        %716 = vmatpush.bf16.msra.mxu0 %v395
        %717 = vmatpush.bf16.msra.mxu0 %v391
        %718 = vmatpush.bf16.msra.mxu0 %v387
        %719 = vmatpush.bf16.msra.mxu0 %v383
        %720 = vmatpush.bf16.msra.mxu0 %v379
        %721 = vmatpush.bf16.msra.mxu0 %v375
        %722 = vmatmul.bf16.gmra.mxu0 %v700
        %v723 = vpop.f32.mrf.mxu0
        %v724 = vadd.f32 0.0, %v723
        %v725 = vpop.f32.mrf.mxu0
        %726 = vdwg.mxu0
        %727 = vmatpush.bf16.msra.mxu0 %v404
        %728 = vmatpush.bf16.msra.mxu0 %v400
        %729 = vmatpush.bf16.msra.mxu0 %v396
        %730 = vmatpush.bf16.msra.mxu0 %v392
        %731 = vmatpush.bf16.msra.mxu0 %v388
        %732 = vmatpush.bf16.msra.mxu0 %v384
        %733 = vmatpush.bf16.msra.mxu0 %v380
        %734 = vmatpush.bf16.msra.mxu0 %v376
        %735 = vmatmul.bf16.gmra.mxu0 %v700
        %v736 = vpop.f32.mrf.mxu0
        %v737 = vadd.f32 0.0, %v736
        %v738 = vpop.f32.mrf.mxu0
        %739 = vdwg.mxu0
        %740 = vmatpush.bf16.msra.mxu0 %v405
        %741 = vmatpush.bf16.msra.mxu0 %v401
        %742 = vmatpush.bf16.msra.mxu0 %v397
        %743 = vmatpush.bf16.msra.mxu0 %v393
        %744 = vmatpush.bf16.msra.mxu0 %v389
        %745 = vmatpush.bf16.msra.mxu0 %v385
        %746 = vmatpush.bf16.msra.mxu0 %v381
        %747 = vmatpush.bf16.msra.mxu0 %v377
        %748 = vmatmul.bf16.gmra.mxu0 %v700
        %v749 = vpop.f32.mrf.mxu0
        %v750 = vadd.f32 0.0, %v749
        %v751 = vpop.f32.mrf.mxu0
        %752 = vdwg.mxu0
        %v753 = vadd.f32 %v695, %v711
        %v754 = vadd.f32 %v696, %v724
        %v755 = vadd.f32 %v697, %v737
        %v756 = vadd.f32 %v698, %v750
        %v757 = vxor.u32 %v753, 2147483648
        %v758 = vmul.f32 %v757, 1.442695
        %v759 = vpow.pop %v758
        %v760 = vadd.f32 %v759, 1.0
        %v761 = vrcp.pop %v760
        %v762 = vmul.f32 %v760, %v761
        %v763 = vsub.f32 1.0, %v762
        %v764 = vmul.f32 %v761, %v763
        %v765 = vadd.f32 %v761, %v764
        %vm766 = vweird.f32 %v760
        %vm767 = vweird.f32 %v761
        %vm768 = vmor %vm766, %vm767
        %v769 = vsel %vm768, %v761, %v765
        %v770 = vand.u32 2147483647, %v760
        %vm771 = vcmp.eq.f32.partialorder %v770, 8.507059e+37
        %v772 = vand.u32 %v760, 2147483648
        %v773 = vor.u32 1.1754944e-38, %v772
        %v774 = vsel %vm771, %v773, %v769
        %v775 = vmul.f32 1.0, %v774
        %v776 = vxor.u32 %v754, 2147483648
        %v777 = vmul.f32 %v776, 1.442695
        %v778 = vpow.pop %v777
        %v779 = vadd.f32 %v778, 1.0
        %v780 = vrcp.pop %v779
        %v781 = vmul.f32 %v779, %v780
        %v782 = vsub.f32 1.0, %v781
        %v783 = vmul.f32 %v780, %v782
        %v784 = vadd.f32 %v780, %v783
        %vm785 = vweird.f32 %v779
        %vm786 = vweird.f32 %v780
        %vm787 = vmor %vm785, %vm786
        %v788 = vsel %vm787, %v780, %v784
        %v789 = vand.u32 2147483647, %v779
        %vm790 = vcmp.eq.f32.partialorder %v789, 8.507059e+37
        %v791 = vand.u32 %v779, 2147483648
        %v792 = vor.u32 1.1754944e-38, %v791
        %v793 = vsel %vm790, %v792, %v788
        %v794 = vmul.f32 1.0, %v793
        %v795 = vtanh.pop %v755
        %v796 = vxor.u32 %v756, 2147483648
        %v797 = vmul.f32 %v796, 1.442695
        %v798 = vpow.pop %v797
        %v799 = vadd.f32 %v798, 1.0
        %v800 = vrcp.pop %v799
        %v801 = vmul.f32 %v799, %v800
        %v802 = vsub.f32 1.0, %v801
        %v803 = vmul.f32 %v800, %v802
        %v804 = vadd.f32 %v800, %v803
        %vm805 = vweird.f32 %v799
        %vm806 = vweird.f32 %v800
        %vm807 = vmor %vm805, %vm806
        %v808 = vsel %vm807, %v800, %v804
        %v809 = vand.u32 2147483647, %v799
        %vm810 = vcmp.eq.f32.partialorder %v809, 8.507059e+37
        %v811 = vand.u32 %v799, 2147483648
        %v812 = vor.u32 1.1754944e-38, %v811
        %v813 = vsel %vm810, %v812, %v808
        %v814 = vmul.f32 1.0, %v813
        %v815 = vld [vmem:[#allocation3] sm:$0xff]
        %v816 = vmul.f32 %v794, %v815
        %v817 = vmul.f32 %v775, %v795
        %v818 = vadd.f32 %v816, %v817
        %v819 = vtanh.pop %v818
        %v820 = vmul.f32 %v814, %v819
        %821 = vst [vmem:[#allocation3] sm:$0xff] %v818
        %822 = vst [vmem:[#allocation2] sm:$0xff] %v820
        %v823 = vpack.c.bf16 %v820, %v820
        %s824 = scalar_lea.vmem %s227, 8 [#allocation9]
        %825 = vst [vmem:[%s824] sm:$0xf] %v823
        %s826 = scalar_lea.vmem %s201, 96 [#allocation4]
        %v827 = vld [vmem:[%s826] sm:$0xff]
        %v828 = vld [vmem:[%s826 + $0x8] sm:$0xff]
        %v829 = vld [vmem:[%s826 + $0x10] sm:$0xff]
        %v830 = vld [vmem:[%s826 + $0x18] sm:$0xff]
        %v831 = vld [vmem:[#allocation2] sm:$0xff]
        %v832 = vpack.c.bf16 %v831, %v831
        %833 = vmatpush.bf16.msra.mxu0 %v402
        %834 = vmatpush.bf16.msra.mxu0 %v398
        %835 = vmatpush.bf16.msra.mxu0 %v394
        %836 = vmatpush.bf16.msra.mxu0 %v390
        %837 = vmatpush.bf16.msra.mxu0 %v386
        %838 = vmatpush.bf16.msra.mxu0 %v382
        %839 = vmatpush.bf16.msra.mxu0 %v378
        %840 = vmatpush.bf16.msra.mxu0 %v374
        %841 = vmatmul.bf16.gmra.mxu0 %v832
        %v842 = vpop.f32.mrf.mxu0
        %v843 = vadd.f32 0.0, %v842
        %v844 = vpop.f32.mrf.mxu0
        %845 = vdwg.mxu0
        %846 = vmatpush.bf16.msra.mxu0 %v403
        %847 = vmatpush.bf16.msra.mxu0 %v399
        %848 = vmatpush.bf16.msra.mxu0 %v395
        %849 = vmatpush.bf16.msra.mxu0 %v391
        %850 = vmatpush.bf16.msra.mxu0 %v387
        %851 = vmatpush.bf16.msra.mxu0 %v383
        %852 = vmatpush.bf16.msra.mxu0 %v379
        %853 = vmatpush.bf16.msra.mxu0 %v375
        %854 = vmatmul.bf16.gmra.mxu0 %v832
        %v855 = vpop.f32.mrf.mxu0
        %v856 = vadd.f32 0.0, %v855
        %v857 = vpop.f32.mrf.mxu0
        %858 = vdwg.mxu0
        %859 = vmatpush.bf16.msra.mxu0 %v404
        %860 = vmatpush.bf16.msra.mxu0 %v400
        %861 = vmatpush.bf16.msra.mxu0 %v396
        %862 = vmatpush.bf16.msra.mxu0 %v392
        %863 = vmatpush.bf16.msra.mxu0 %v388
        %864 = vmatpush.bf16.msra.mxu0 %v384
        %865 = vmatpush.bf16.msra.mxu0 %v380
        %866 = vmatpush.bf16.msra.mxu0 %v376
        %867 = vmatmul.bf16.gmra.mxu0 %v832
        %v868 = vpop.f32.mrf.mxu0
        %v869 = vadd.f32 0.0, %v868
        %v870 = vpop.f32.mrf.mxu0
        %871 = vdwg.mxu0
        %872 = vmatpush.bf16.msra.mxu0 %v405
        %873 = vmatpush.bf16.msra.mxu0 %v401
        %874 = vmatpush.bf16.msra.mxu0 %v397
        %875 = vmatpush.bf16.msra.mxu0 %v393
        %876 = vmatpush.bf16.msra.mxu0 %v389
        %877 = vmatpush.bf16.msra.mxu0 %v385
        %878 = vmatpush.bf16.msra.mxu0 %v381
        %879 = vmatpush.bf16.msra.mxu0 %v377
        %880 = vmatmul.bf16.gmra.mxu0 %v832
        %v881 = vpop.f32.mrf.mxu0
        %v882 = vadd.f32 0.0, %v881
        %v883 = vpop.f32.mrf.mxu0
        %884 = vdwg.mxu0
        %v885 = vadd.f32 %v827, %v843
        %v886 = vadd.f32 %v828, %v856
        %v887 = vadd.f32 %v829, %v869
        %v888 = vadd.f32 %v830, %v882
        %v889 = vxor.u32 %v885, 2147483648
        %v890 = vmul.f32 %v889, 1.442695
        %v891 = vpow.pop %v890
        %v892 = vadd.f32 %v891, 1.0
        %v893 = vrcp.pop %v892
        %v894 = vmul.f32 %v892, %v893
        %v895 = vsub.f32 1.0, %v894
        %v896 = vmul.f32 %v893, %v895
        %v897 = vadd.f32 %v893, %v896
        %vm898 = vweird.f32 %v892
        %vm899 = vweird.f32 %v893
        %vm900 = vmor %vm898, %vm899
        %v901 = vsel %vm900, %v893, %v897
        %v902 = vand.u32 2147483647, %v892
        %vm903 = vcmp.eq.f32.partialorder %v902, 8.507059e+37
        %v904 = vand.u32 %v892, 2147483648
        %v905 = vor.u32 1.1754944e-38, %v904
        %v906 = vsel %vm903, %v905, %v901
        %v907 = vmul.f32 1.0, %v906
        %v908 = vxor.u32 %v886, 2147483648
        %v909 = vmul.f32 %v908, 1.442695
        %v910 = vpow.pop %v909
        %v911 = vadd.f32 %v910, 1.0
        %v912 = vrcp.pop %v911
        %v913 = vmul.f32 %v911, %v912
        %v914 = vsub.f32 1.0, %v913
        %v915 = vmul.f32 %v912, %v914
        %v916 = vadd.f32 %v912, %v915
        %vm917 = vweird.f32 %v911
        %vm918 = vweird.f32 %v912
        %vm919 = vmor %vm917, %vm918
        %v920 = vsel %vm919, %v912, %v916
        %v921 = vand.u32 2147483647, %v911
        %vm922 = vcmp.eq.f32.partialorder %v921, 8.507059e+37
        %v923 = vand.u32 %v911, 2147483648
        %v924 = vor.u32 1.1754944e-38, %v923
        %v925 = vsel %vm922, %v924, %v920
        %v926 = vmul.f32 1.0, %v925
        %v927 = vtanh.pop %v887
        %v928 = vxor.u32 %v888, 2147483648
        %v929 = vmul.f32 %v928, 1.442695
        %v930 = vpow.pop %v929
        %v931 = vadd.f32 %v930, 1.0
        %v932 = vrcp.pop %v931
        %v933 = vmul.f32 %v931, %v932
        %v934 = vsub.f32 1.0, %v933
        %v935 = vmul.f32 %v932, %v934
        %v936 = vadd.f32 %v932, %v935
        %vm937 = vweird.f32 %v931
        %vm938 = vweird.f32 %v932
        %vm939 = vmor %vm937, %vm938
        %v940 = vsel %vm939, %v932, %v936
        %v941 = vand.u32 2147483647, %v931
        %vm942 = vcmp.eq.f32.partialorder %v941, 8.507059e+37
        %v943 = vand.u32 %v931, 2147483648
        %v944 = vor.u32 1.1754944e-38, %v943
        %v945 = vsel %vm942, %v944, %v940
        %v946 = vmul.f32 1.0, %v945
        %v947 = vld [vmem:[#allocation3] sm:$0xff]
        %v948 = vmul.f32 %v926, %v947
        %v949 = vmul.f32 %v907, %v927
        %v950 = vadd.f32 %v948, %v949
        %v951 = vtanh.pop %v950
        %v952 = vmul.f32 %v946, %v951
        %953 = vst [vmem:[#allocation3] sm:$0xff] %v950
        %954 = vst [vmem:[#allocation2] sm:$0xff] %v952
        %v955 = vpack.c.bf16 %v952, %v952
        %s956 = scalar_lea.vmem %s227, 12 [#allocation9]
        %957 = vst [vmem:[%s956] sm:$0xf] %v955
        %s958 = scalar_lea.vmem %s201, 128 [#allocation4]
        %v959 = vld [vmem:[%s958] sm:$0xff]
        %v960 = vld [vmem:[%s958 + $0x8] sm:$0xff]
        %v961 = vld [vmem:[%s958 + $0x10] sm:$0xff]
        %v962 = vld [vmem:[%s958 + $0x18] sm:$0xff]
        %v963 = vld [vmem:[#allocation2] sm:$0xff]
        %v964 = vpack.c.bf16 %v963, %v963
        %965 = vmatpush.bf16.msra.mxu0 %v402
        %966 = vmatpush.bf16.msra.mxu0 %v398
        %967 = vmatpush.bf16.msra.mxu0 %v394
        %968 = vmatpush.bf16.msra.mxu0 %v390
        %969 = vmatpush.bf16.msra.mxu0 %v386
        %970 = vmatpush.bf16.msra.mxu0 %v382
        %971 = vmatpush.bf16.msra.mxu0 %v378
        %972 = vmatpush.bf16.msra.mxu0 %v374
        %973 = vmatmul.bf16.gmra.mxu0 %v964
        %v974 = vpop.f32.mrf.mxu0
        %v975 = vadd.f32 0.0, %v974
        %v976 = vpop.f32.mrf.mxu0
        %977 = vdwg.mxu0
        %978 = vmatpush.bf16.msra.mxu0 %v403
        %979 = vmatpush.bf16.msra.mxu0 %v399
        %980 = vmatpush.bf16.msra.mxu0 %v395
        %981 = vmatpush.bf16.msra.mxu0 %v391
        %982 = vmatpush.bf16.msra.mxu0 %v387
        %983 = vmatpush.bf16.msra.mxu0 %v383
        %984 = vmatpush.bf16.msra.mxu0 %v379
        %985 = vmatpush.bf16.msra.mxu0 %v375
        %986 = vmatmul.bf16.gmra.mxu0 %v964
        %v987 = vpop.f32.mrf.mxu0
        %v988 = vadd.f32 0.0, %v987
        %v989 = vpop.f32.mrf.mxu0
        %990 = vdwg.mxu0
        %991 = vmatpush.bf16.msra.mxu0 %v404
        %992 = vmatpush.bf16.msra.mxu0 %v400
        %993 = vmatpush.bf16.msra.mxu0 %v396
        %994 = vmatpush.bf16.msra.mxu0 %v392
        %995 = vmatpush.bf16.msra.mxu0 %v388
        %996 = vmatpush.bf16.msra.mxu0 %v384
        %997 = vmatpush.bf16.msra.mxu0 %v380
        %998 = vmatpush.bf16.msra.mxu0 %v376
        %999 = vmatmul.bf16.gmra.mxu0 %v964
        %v1000 = vpop.f32.mrf.mxu0
        %v1001 = vadd.f32 0.0, %v1000
        %v1002 = vpop.f32.mrf.mxu0
        %1003 = vdwg.mxu0
        %1004 = vmatpush.bf16.msra.mxu0 %v405
        %1005 = vmatpush.bf16.msra.mxu0 %v401
        %1006 = vmatpush.bf16.msra.mxu0 %v397
        %1007 = vmatpush.bf16.msra.mxu0 %v393
        %1008 = vmatpush.bf16.msra.mxu0 %v389
        %1009 = vmatpush.bf16.msra.mxu0 %v385
        %1010 = vmatpush.bf16.msra.mxu0 %v381
        %1011 = vmatpush.bf16.msra.mxu0 %v377
        %1012 = vmatmul.bf16.gmra.mxu0 %v964
        %v1013 = vpop.f32.mrf.mxu0
        %v1014 = vadd.f32 0.0, %v1013
        %v1015 = vpop.f32.mrf.mxu0
        %1016 = vdwg.mxu0
        %v1017 = vadd.f32 %v959, %v975
        %v1018 = vadd.f32 %v960, %v988
        %v1019 = vadd.f32 %v961, %v1001
        %v1020 = vadd.f32 %v962, %v1014
        %v1021 = vxor.u32 %v1017, 2147483648
        %v1022 = vmul.f32 %v1021, 1.442695
        %v1023 = vpow.pop %v1022
        %v1024 = vadd.f32 %v1023, 1.0
        %v1025 = vrcp.pop %v1024
        %v1026 = vmul.f32 %v1024, %v1025
        %v1027 = vsub.f32 1.0, %v1026
        %v1028 = vmul.f32 %v1025, %v1027
        %v1029 = vadd.f32 %v1025, %v1028
        %vm1030 = vweird.f32 %v1024
        %vm1031 = vweird.f32 %v1025
        %vm1032 = vmor %vm1030, %vm1031
        %v1033 = vsel %vm1032, %v1025, %v1029
        %v1034 = vand.u32 2147483647, %v1024
        %vm1035 = vcmp.eq.f32.partialorder %v1034, 8.507059e+37
        %v1036 = vand.u32 %v1024, 2147483648
        %v1037 = vor.u32 1.1754944e-38, %v1036
        %v1038 = vsel %vm1035, %v1037, %v1033
        %v1039 = vmul.f32 1.0, %v1038
        %v1040 = vxor.u32 %v1018, 2147483648
        %v1041 = vmul.f32 %v1040, 1.442695
        %v1042 = vpow.pop %v1041
        %v1043 = vadd.f32 %v1042, 1.0
        %v1044 = vrcp.pop %v1043
        %v1045 = vmul.f32 %v1043, %v1044
        %v1046 = vsub.f32 1.0, %v1045
        %v1047 = vmul.f32 %v1044, %v1046
        %v1048 = vadd.f32 %v1044, %v1047
        %vm1049 = vweird.f32 %v1043
        %vm1050 = vweird.f32 %v1044
        %vm1051 = vmor %vm1049, %vm1050
        %v1052 = vsel %vm1051, %v1044, %v1048
        %v1053 = vand.u32 2147483647, %v1043
        %vm1054 = vcmp.eq.f32.partialorder %v1053, 8.507059e+37
        %v1055 = vand.u32 %v1043, 2147483648
        %v1056 = vor.u32 1.1754944e-38, %v1055
        %v1057 = vsel %vm1054, %v1056, %v1052
        %v1058 = vmul.f32 1.0, %v1057
        %v1059 = vtanh.pop %v1019
        %v1060 = vxor.u32 %v1020, 2147483648
        %v1061 = vmul.f32 %v1060, 1.442695
        %v1062 = vpow.pop %v1061
        %v1063 = vadd.f32 %v1062, 1.0
        %v1064 = vrcp.pop %v1063
        %v1065 = vmul.f32 %v1063, %v1064
        %v1066 = vsub.f32 1.0, %v1065
        %v1067 = vmul.f32 %v1064, %v1066
        %v1068 = vadd.f32 %v1064, %v1067
        %vm1069 = vweird.f32 %v1063
        %vm1070 = vweird.f32 %v1064
        %vm1071 = vmor %vm1069, %vm1070
        %v1072 = vsel %vm1071, %v1064, %v1068
        %v1073 = vand.u32 2147483647, %v1063
        %vm1074 = vcmp.eq.f32.partialorder %v1073, 8.507059e+37
        %v1075 = vand.u32 %v1063, 2147483648
        %v1076 = vor.u32 1.1754944e-38, %v1075
        %v1077 = vsel %vm1074, %v1076, %v1072
        %v1078 = vmul.f32 1.0, %v1077
        %v1079 = vld [vmem:[#allocation3] sm:$0xff]
        %v1080 = vmul.f32 %v1058, %v1079
        %v1081 = vmul.f32 %v1039, %v1059
        %v1082 = vadd.f32 %v1080, %v1081
        %v1083 = vtanh.pop %v1082
        %v1084 = vmul.f32 %v1078, %v1083
        %1085 = vst [vmem:[#allocation3] sm:$0xff] %v1082
        %1086 = vst [vmem:[#allocation2] sm:$0xff] %v1084
        %v1087 = vpack.c.bf16 %v1084, %v1084
        %s1088 = scalar_lea.vmem %s227, 16 [#allocation9]
        %1089 = vst [vmem:[%s1088] sm:$0xf] %v1087
        %s1090 = scalar_lea.vmem %s201, 160 [#allocation4]
        %v1091 = vld [vmem:[%s1090] sm:$0xff]
        %v1092 = vld [vmem:[%s1090 + $0x8] sm:$0xff]
        %v1093 = vld [vmem:[%s1090 + $0x10] sm:$0xff]
        %v1094 = vld [vmem:[%s1090 + $0x18] sm:$0xff]
        %v1095 = vld [vmem:[#allocation2] sm:$0xff]
        %v1096 = vpack.c.bf16 %v1095, %v1095
        %1097 = vmatpush.bf16.msra.mxu0 %v402
        %1098 = vmatpush.bf16.msra.mxu0 %v398
        %1099 = vmatpush.bf16.msra.mxu0 %v394
        %1100 = vmatpush.bf16.msra.mxu0 %v390
        %1101 = vmatpush.bf16.msra.mxu0 %v386
        %1102 = vmatpush.bf16.msra.mxu0 %v382
        %1103 = vmatpush.bf16.msra.mxu0 %v378
        %1104 = vmatpush.bf16.msra.mxu0 %v374
        %1105 = vmatmul.bf16.gmra.mxu0 %v1096
        %v1106 = vpop.f32.mrf.mxu0
        %v1107 = vadd.f32 0.0, %v1106
        %v1108 = vpop.f32.mrf.mxu0
        %1109 = vdwg.mxu0
        %1110 = vmatpush.bf16.msra.mxu0 %v403
        %1111 = vmatpush.bf16.msra.mxu0 %v399
        %1112 = vmatpush.bf16.msra.mxu0 %v395
        %1113 = vmatpush.bf16.msra.mxu0 %v391
        %1114 = vmatpush.bf16.msra.mxu0 %v387
        %1115 = vmatpush.bf16.msra.mxu0 %v383
        %1116 = vmatpush.bf16.msra.mxu0 %v379
        %1117 = vmatpush.bf16.msra.mxu0 %v375
        %1118 = vmatmul.bf16.gmra.mxu0 %v1096
        %v1119 = vpop.f32.mrf.mxu0
        %v1120 = vadd.f32 0.0, %v1119
        %v1121 = vpop.f32.mrf.mxu0
        %1122 = vdwg.mxu0
        %1123 = vmatpush.bf16.msra.mxu0 %v404
        %1124 = vmatpush.bf16.msra.mxu0 %v400
        %1125 = vmatpush.bf16.msra.mxu0 %v396
        %1126 = vmatpush.bf16.msra.mxu0 %v392
        %1127 = vmatpush.bf16.msra.mxu0 %v388
        %1128 = vmatpush.bf16.msra.mxu0 %v384
        %1129 = vmatpush.bf16.msra.mxu0 %v380
        %1130 = vmatpush.bf16.msra.mxu0 %v376
        %1131 = vmatmul.bf16.gmra.mxu0 %v1096
        %v1132 = vpop.f32.mrf.mxu0
        %v1133 = vadd.f32 0.0, %v1132
        %v1134 = vpop.f32.mrf.mxu0
        %1135 = vdwg.mxu0
        %1136 = vmatpush.bf16.msra.mxu0 %v405
        %1137 = vmatpush.bf16.msra.mxu0 %v401
        %1138 = vmatpush.bf16.msra.mxu0 %v397
        %1139 = vmatpush.bf16.msra.mxu0 %v393
        %1140 = vmatpush.bf16.msra.mxu0 %v389
        %1141 = vmatpush.bf16.msra.mxu0 %v385
        %1142 = vmatpush.bf16.msra.mxu0 %v381
        %1143 = vmatpush.bf16.msra.mxu0 %v377
        %1144 = vmatmul.bf16.gmra.mxu0 %v1096
        %v1145 = vpop.f32.mrf.mxu0
        %v1146 = vadd.f32 0.0, %v1145
        %v1147 = vpop.f32.mrf.mxu0
        %1148 = vdwg.mxu0
        %v1149 = vadd.f32 %v1091, %v1107
        %v1150 = vadd.f32 %v1092, %v1120
        %v1151 = vadd.f32 %v1093, %v1133
        %v1152 = vadd.f32 %v1094, %v1146
        %v1153 = vxor.u32 %v1149, 2147483648
        %v1154 = vmul.f32 %v1153, 1.442695
        %v1155 = vpow.pop %v1154
        %v1156 = vadd.f32 %v1155, 1.0
        %v1157 = vrcp.pop %v1156
        %v1158 = vmul.f32 %v1156, %v1157
        %v1159 = vsub.f32 1.0, %v1158
        %v1160 = vmul.f32 %v1157, %v1159
        %v1161 = vadd.f32 %v1157, %v1160
        %vm1162 = vweird.f32 %v1156
        %vm1163 = vweird.f32 %v1157
        %vm1164 = vmor %vm1162, %vm1163
        %v1165 = vsel %vm1164, %v1157, %v1161
        %v1166 = vand.u32 2147483647, %v1156
        %vm1167 = vcmp.eq.f32.partialorder %v1166, 8.507059e+37
        %v1168 = vand.u32 %v1156, 2147483648
        %v1169 = vor.u32 1.1754944e-38, %v1168
        %v1170 = vsel %vm1167, %v1169, %v1165
        %v1171 = vmul.f32 1.0, %v1170
        %v1172 = vxor.u32 %v1150, 2147483648
        %v1173 = vmul.f32 %v1172, 1.442695
        %v1174 = vpow.pop %v1173
        %v1175 = vadd.f32 %v1174, 1.0
        %v1176 = vrcp.pop %v1175
        %v1177 = vmul.f32 %v1175, %v1176
        %v1178 = vsub.f32 1.0, %v1177
        %v1179 = vmul.f32 %v1176, %v1178
        %v1180 = vadd.f32 %v1176, %v1179
        %vm1181 = vweird.f32 %v1175
        %vm1182 = vweird.f32 %v1176
        %vm1183 = vmor %vm1181, %vm1182
        %v1184 = vsel %vm1183, %v1176, %v1180
        %v1185 = vand.u32 2147483647, %v1175
        %vm1186 = vcmp.eq.f32.partialorder %v1185, 8.507059e+37
        %v1187 = vand.u32 %v1175, 2147483648
        %v1188 = vor.u32 1.1754944e-38, %v1187
        %v1189 = vsel %vm1186, %v1188, %v1184
        %v1190 = vmul.f32 1.0, %v1189
        %v1191 = vtanh.pop %v1151
        %v1192 = vxor.u32 %v1152, 2147483648
        %v1193 = vmul.f32 %v1192, 1.442695
        %v1194 = vpow.pop %v1193
        %v1195 = vadd.f32 %v1194, 1.0
        %v1196 = vrcp.pop %v1195
        %v1197 = vmul.f32 %v1195, %v1196
        %v1198 = vsub.f32 1.0, %v1197
        %v1199 = vmul.f32 %v1196, %v1198
        %v1200 = vadd.f32 %v1196, %v1199
        %vm1201 = vweird.f32 %v1195
        %vm1202 = vweird.f32 %v1196
        %vm1203 = vmor %vm1201, %vm1202
        %v1204 = vsel %vm1203, %v1196, %v1200
        %v1205 = vand.u32 2147483647, %v1195
        %vm1206 = vcmp.eq.f32.partialorder %v1205, 8.507059e+37
        %v1207 = vand.u32 %v1195, 2147483648
        %v1208 = vor.u32 1.1754944e-38, %v1207
        %v1209 = vsel %vm1206, %v1208, %v1204
        %v1210 = vmul.f32 1.0, %v1209
        %v1211 = vld [vmem:[#allocation3] sm:$0xff]
        %v1212 = vmul.f32 %v1190, %v1211
        %v1213 = vmul.f32 %v1171, %v1191
        %v1214 = vadd.f32 %v1212, %v1213
        %v1215 = vtanh.pop %v1214
        %v1216 = vmul.f32 %v1210, %v1215
        %1217 = vst [vmem:[#allocation3] sm:$0xff] %v1214
        %1218 = vst [vmem:[#allocation2] sm:$0xff] %v1216
        %v1219 = vpack.c.bf16 %v1216, %v1216
        %s1220 = scalar_lea.vmem %s227, 20 [#allocation9]
        %1221 = vst [vmem:[%s1220] sm:$0xf] %v1219
        %s1222 = scalar_lea.vmem %s201, 192 [#allocation4]
        %v1223 = vld [vmem:[%s1222] sm:$0xff]
        %v1224 = vld [vmem:[%s1222 + $0x8] sm:$0xff]
        %v1225 = vld [vmem:[%s1222 + $0x10] sm:$0xff]
        %v1226 = vld [vmem:[%s1222 + $0x18] sm:$0xff]
        %v1227 = vld [vmem:[#allocation2] sm:$0xff]
        %v1228 = vpack.c.bf16 %v1227, %v1227
        %1229 = vmatpush.bf16.msra.mxu0 %v402
        %1230 = vmatpush.bf16.msra.mxu0 %v398
        %1231 = vmatpush.bf16.msra.mxu0 %v394
        %1232 = vmatpush.bf16.msra.mxu0 %v390
        %1233 = vmatpush.bf16.msra.mxu0 %v386
        %1234 = vmatpush.bf16.msra.mxu0 %v382
        %1235 = vmatpush.bf16.msra.mxu0 %v378
        %1236 = vmatpush.bf16.msra.mxu0 %v374
        %1237 = vmatmul.bf16.gmra.mxu0 %v1228
        %v1238 = vpop.f32.mrf.mxu0
        %v1239 = vadd.f32 0.0, %v1238
        %v1240 = vpop.f32.mrf.mxu0
        %1241 = vdwg.mxu0
        %1242 = vmatpush.bf16.msra.mxu0 %v403
        %1243 = vmatpush.bf16.msra.mxu0 %v399
        %1244 = vmatpush.bf16.msra.mxu0 %v395
        %1245 = vmatpush.bf16.msra.mxu0 %v391
        %1246 = vmatpush.bf16.msra.mxu0 %v387
        %1247 = vmatpush.bf16.msra.mxu0 %v383
        %1248 = vmatpush.bf16.msra.mxu0 %v379
        %1249 = vmatpush.bf16.msra.mxu0 %v375
        %1250 = vmatmul.bf16.gmra.mxu0 %v1228
        %v1251 = vpop.f32.mrf.mxu0
        %v1252 = vadd.f32 0.0, %v1251
        %v1253 = vpop.f32.mrf.mxu0
        %1254 = vdwg.mxu0
        %1255 = vmatpush.bf16.msra.mxu0 %v404
        %1256 = vmatpush.bf16.msra.mxu0 %v400
        %1257 = vmatpush.bf16.msra.mxu0 %v396
        %1258 = vmatpush.bf16.msra.mxu0 %v392
        %1259 = vmatpush.bf16.msra.mxu0 %v388
        %1260 = vmatpush.bf16.msra.mxu0 %v384
        %1261 = vmatpush.bf16.msra.mxu0 %v380
        %1262 = vmatpush.bf16.msra.mxu0 %v376
        %1263 = vmatmul.bf16.gmra.mxu0 %v1228
        %v1264 = vpop.f32.mrf.mxu0
        %v1265 = vadd.f32 0.0, %v1264
        %v1266 = vpop.f32.mrf.mxu0
        %1267 = vdwg.mxu0
        %1268 = vmatpush.bf16.msra.mxu0 %v405
        %1269 = vmatpush.bf16.msra.mxu0 %v401
        %1270 = vmatpush.bf16.msra.mxu0 %v397
        %1271 = vmatpush.bf16.msra.mxu0 %v393
        %1272 = vmatpush.bf16.msra.mxu0 %v389
        %1273 = vmatpush.bf16.msra.mxu0 %v385
        %1274 = vmatpush.bf16.msra.mxu0 %v381
        %1275 = vmatpush.bf16.msra.mxu0 %v377
        %1276 = vmatmul.bf16.gmra.mxu0 %v1228
        %v1277 = vpop.f32.mrf.mxu0
        %v1278 = vadd.f32 0.0, %v1277
        %v1279 = vpop.f32.mrf.mxu0
        %1280 = vdwg.mxu0
        %v1281 = vadd.f32 %v1223, %v1239
        %v1282 = vadd.f32 %v1224, %v1252
        %v1283 = vadd.f32 %v1225, %v1265
        %v1284 = vadd.f32 %v1226, %v1278
        %v1285 = vxor.u32 %v1281, 2147483648
        %v1286 = vmul.f32 %v1285, 1.442695
        %v1287 = vpow.pop %v1286
        %v1288 = vadd.f32 %v1287, 1.0
        %v1289 = vrcp.pop %v1288
        %v1290 = vmul.f32 %v1288, %v1289
        %v1291 = vsub.f32 1.0, %v1290
        %v1292 = vmul.f32 %v1289, %v1291
        %v1293 = vadd.f32 %v1289, %v1292
        %vm1294 = vweird.f32 %v1288
        %vm1295 = vweird.f32 %v1289
        %vm1296 = vmor %vm1294, %vm1295
        %v1297 = vsel %vm1296, %v1289, %v1293
        %v1298 = vand.u32 2147483647, %v1288
        %vm1299 = vcmp.eq.f32.partialorder %v1298, 8.507059e+37
        %v1300 = vand.u32 %v1288, 2147483648
        %v1301 = vor.u32 1.1754944e-38, %v1300
        %v1302 = vsel %vm1299, %v1301, %v1297
        %v1303 = vmul.f32 1.0, %v1302
        %v1304 = vxor.u32 %v1282, 2147483648
        %v1305 = vmul.f32 %v1304, 1.442695
        %v1306 = vpow.pop %v1305
        %v1307 = vadd.f32 %v1306, 1.0
        %v1308 = vrcp.pop %v1307
        %v1309 = vmul.f32 %v1307, %v1308
        %v1310 = vsub.f32 1.0, %v1309
        %v1311 = vmul.f32 %v1308, %v1310
        %v1312 = vadd.f32 %v1308, %v1311
        %vm1313 = vweird.f32 %v1307
        %vm1314 = vweird.f32 %v1308
        %vm1315 = vmor %vm1313, %vm1314
        %v1316 = vsel %vm1315, %v1308, %v1312
        %v1317 = vand.u32 2147483647, %v1307
        %vm1318 = vcmp.eq.f32.partialorder %v1317, 8.507059e+37
        %v1319 = vand.u32 %v1307, 2147483648
        %v1320 = vor.u32 1.1754944e-38, %v1319
        %v1321 = vsel %vm1318, %v1320, %v1316
        %v1322 = vmul.f32 1.0, %v1321
        %v1323 = vtanh.pop %v1283
        %v1324 = vxor.u32 %v1284, 2147483648
        %v1325 = vmul.f32 %v1324, 1.442695
        %v1326 = vpow.pop %v1325
        %v1327 = vadd.f32 %v1326, 1.0
        %v1328 = vrcp.pop %v1327
        %v1329 = vmul.f32 %v1327, %v1328
        %v1330 = vsub.f32 1.0, %v1329
        %v1331 = vmul.f32 %v1328, %v1330
        %v1332 = vadd.f32 %v1328, %v1331
        %vm1333 = vweird.f32 %v1327
        %vm1334 = vweird.f32 %v1328
        %vm1335 = vmor %vm1333, %vm1334
        %v1336 = vsel %vm1335, %v1328, %v1332
        %v1337 = vand.u32 2147483647, %v1327
        %vm1338 = vcmp.eq.f32.partialorder %v1337, 8.507059e+37
        %v1339 = vand.u32 %v1327, 2147483648
        %v1340 = vor.u32 1.1754944e-38, %v1339
        %v1341 = vsel %vm1338, %v1340, %v1336
        %v1342 = vmul.f32 1.0, %v1341
        %v1343 = vld [vmem:[#allocation3] sm:$0xff]
        %v1344 = vmul.f32 %v1322, %v1343
        %v1345 = vmul.f32 %v1303, %v1323
        %v1346 = vadd.f32 %v1344, %v1345
        %v1347 = vtanh.pop %v1346
        %v1348 = vmul.f32 %v1342, %v1347
        %1349 = vst [vmem:[#allocation3] sm:$0xff] %v1346
        %1350 = vst [vmem:[#allocation2] sm:$0xff] %v1348
        %v1351 = vpack.c.bf16 %v1348, %v1348
        %s1352 = scalar_lea.vmem %s227, 24 [#allocation9]
        %1353 = vst [vmem:[%s1352] sm:$0xf] %v1351
        %s1354 = scalar_lea.vmem %s201, 224 [#allocation4]
        %v1355 = vld [vmem:[%s1354] sm:$0xff]
        %v1356 = vld [vmem:[%s1354 + $0x8] sm:$0xff]
        %v1357 = vld [vmem:[%s1354 + $0x10] sm:$0xff]
        %v1358 = vld [vmem:[%s1354 + $0x18] sm:$0xff]
        %v1359 = vld [vmem:[#allocation2] sm:$0xff]
        %v1360 = vpack.c.bf16 %v1359, %v1359
        %1361 = vmatpush.bf16.msra.mxu0 %v402
        %1362 = vmatpush.bf16.msra.mxu0 %v398
        %1363 = vmatpush.bf16.msra.mxu0 %v394
        %1364 = vmatpush.bf16.msra.mxu0 %v390
        %1365 = vmatpush.bf16.msra.mxu0 %v386
        %1366 = vmatpush.bf16.msra.mxu0 %v382
        %1367 = vmatpush.bf16.msra.mxu0 %v378
        %1368 = vmatpush.bf16.msra.mxu0 %v374
        %1369 = vmatmul.bf16.gmra.mxu0 %v1360
        %v1370 = vpop.f32.mrf.mxu0
        %v1371 = vadd.f32 0.0, %v1370
        %v1372 = vpop.f32.mrf.mxu0
        %1373 = vdwg.mxu0
        %1374 = vmatpush.bf16.msra.mxu0 %v403
        %1375 = vmatpush.bf16.msra.mxu0 %v399
        %1376 = vmatpush.bf16.msra.mxu0 %v395
        %1377 = vmatpush.bf16.msra.mxu0 %v391
        %1378 = vmatpush.bf16.msra.mxu0 %v387
        %1379 = vmatpush.bf16.msra.mxu0 %v383
        %1380 = vmatpush.bf16.msra.mxu0 %v379
        %1381 = vmatpush.bf16.msra.mxu0 %v375
        %1382 = vmatmul.bf16.gmra.mxu0 %v1360
        %v1383 = vpop.f32.mrf.mxu0
        %v1384 = vadd.f32 0.0, %v1383
        %v1385 = vpop.f32.mrf.mxu0
        %1386 = vdwg.mxu0
        %1387 = vmatpush.bf16.msra.mxu0 %v404
        %1388 = vmatpush.bf16.msra.mxu0 %v400
        %1389 = vmatpush.bf16.msra.mxu0 %v396
        %1390 = vmatpush.bf16.msra.mxu0 %v392
        %1391 = vmatpush.bf16.msra.mxu0 %v388
        %1392 = vmatpush.bf16.msra.mxu0 %v384
        %1393 = vmatpush.bf16.msra.mxu0 %v380
        %1394 = vmatpush.bf16.msra.mxu0 %v376
        %1395 = vmatmul.bf16.gmra.mxu0 %v1360
        %v1396 = vpop.f32.mrf.mxu0
        %v1397 = vadd.f32 0.0, %v1396
        %v1398 = vpop.f32.mrf.mxu0
        %1399 = vdwg.mxu0
        %1400 = vmatpush.bf16.msra.mxu0 %v405
        %1401 = vmatpush.bf16.msra.mxu0 %v401
        %1402 = vmatpush.bf16.msra.mxu0 %v397
        %1403 = vmatpush.bf16.msra.mxu0 %v393
        %1404 = vmatpush.bf16.msra.mxu0 %v389
        %1405 = vmatpush.bf16.msra.mxu0 %v385
        %1406 = vmatpush.bf16.msra.mxu0 %v381
        %1407 = vmatpush.bf16.msra.mxu0 %v377
        %1408 = vmatmul.bf16.gmra.mxu0 %v1360
        %v1409 = vpop.f32.mrf.mxu0
        %v1410 = vadd.f32 0.0, %v1409
        %v1411 = vpop.f32.mrf.mxu0
        %1412 = vdwg.mxu0
        %v1413 = vadd.f32 %v1355, %v1371
        %v1414 = vadd.f32 %v1356, %v1384
        %v1415 = vadd.f32 %v1357, %v1397
        %v1416 = vadd.f32 %v1358, %v1410
        %v1417 = vxor.u32 %v1413, 2147483648
        %v1418 = vmul.f32 %v1417, 1.442695
        %v1419 = vpow.pop %v1418
        %v1420 = vadd.f32 %v1419, 1.0
        %v1421 = vrcp.pop %v1420
        %v1422 = vmul.f32 %v1420, %v1421
        %v1423 = vsub.f32 1.0, %v1422
        %v1424 = vmul.f32 %v1421, %v1423
        %v1425 = vadd.f32 %v1421, %v1424
        %vm1426 = vweird.f32 %v1420
        %vm1427 = vweird.f32 %v1421
        %vm1428 = vmor %vm1426, %vm1427
        %v1429 = vsel %vm1428, %v1421, %v1425
        %v1430 = vand.u32 2147483647, %v1420
        %vm1431 = vcmp.eq.f32.partialorder %v1430, 8.507059e+37
        %v1432 = vand.u32 %v1420, 2147483648
        %v1433 = vor.u32 1.1754944e-38, %v1432
        %v1434 = vsel %vm1431, %v1433, %v1429
        %v1435 = vmul.f32 1.0, %v1434
        %v1436 = vxor.u32 %v1414, 2147483648
        %v1437 = vmul.f32 %v1436, 1.442695
        %v1438 = vpow.pop %v1437
        %v1439 = vadd.f32 %v1438, 1.0
        %v1440 = vrcp.pop %v1439
        %v1441 = vmul.f32 %v1439, %v1440
        %v1442 = vsub.f32 1.0, %v1441
        %v1443 = vmul.f32 %v1440, %v1442
        %v1444 = vadd.f32 %v1440, %v1443
        %vm1445 = vweird.f32 %v1439
        %vm1446 = vweird.f32 %v1440
        %vm1447 = vmor %vm1445, %vm1446
        %v1448 = vsel %vm1447, %v1440, %v1444
        %v1449 = vand.u32 2147483647, %v1439
        %vm1450 = vcmp.eq.f32.partialorder %v1449, 8.507059e+37
        %v1451 = vand.u32 %v1439, 2147483648
        %v1452 = vor.u32 1.1754944e-38, %v1451
        %v1453 = vsel %vm1450, %v1452, %v1448
        %v1454 = vmul.f32 1.0, %v1453
        %v1455 = vtanh.pop %v1415
        %v1456 = vxor.u32 %v1416, 2147483648
        %v1457 = vmul.f32 %v1456, 1.442695
        %v1458 = vpow.pop %v1457
        %v1459 = vadd.f32 %v1458, 1.0
        %v1460 = vrcp.pop %v1459
        %v1461 = vmul.f32 %v1459, %v1460
        %v1462 = vsub.f32 1.0, %v1461
        %v1463 = vmul.f32 %v1460, %v1462
        %v1464 = vadd.f32 %v1460, %v1463
        %vm1465 = vweird.f32 %v1459
        %vm1466 = vweird.f32 %v1460
        %vm1467 = vmor %vm1465, %vm1466
        %v1468 = vsel %vm1467, %v1460, %v1464
        %v1469 = vand.u32 2147483647, %v1459
        %vm1470 = vcmp.eq.f32.partialorder %v1469, 8.507059e+37
        %v1471 = vand.u32 %v1459, 2147483648
        %v1472 = vor.u32 1.1754944e-38, %v1471
        %v1473 = vsel %vm1470, %v1472, %v1468
        %v1474 = vmul.f32 1.0, %v1473
        %v1475 = vld [vmem:[#allocation3] sm:$0xff]
        %v1476 = vmul.f32 %v1454, %v1475
        %v1477 = vmul.f32 %v1435, %v1455
        %v1478 = vadd.f32 %v1476, %v1477
        %v1479 = vtanh.pop %v1478
        %v1480 = vmul.f32 %v1474, %v1479
        %1481 = vst [vmem:[#allocation3] sm:$0xff] %v1478
        %1482 = vst [vmem:[#allocation2] sm:$0xff] %v1480
        %v1483 = vpack.c.bf16 %v1480, %v1480
        %s1484 = scalar_lea.vmem %s227, 28 [#allocation9]
        %1485 = vst [vmem:[%s1484] sm:$0xf] %v1483
        %p1486 = scmp.eq.s32.totalorder %s24, 1
        // Predicated region
        $region41: #{tpu_custom_call.1} parent=27 // pred_check
          %p1487 = pneg %p1486
        $region42: #{tpu_custom_call.1} parent=27 // pred_check_branch
          %1489 = sbr.rel (%p1487) target = $region44
        $region43: #{tpu_custom_call.1} parent=27 // pred_region
          %v1490 = vld [vmem:[#allocation2] sm:$0xff]
          %1491 = vst [vmem:[#allocation10] sm:$0xff] %v1490
          %v1492 = vld [vmem:[#allocation3] sm:$0xff]
          %1493 = vst [vmem:[#allocation12] sm:$0xff] %v1492
        $region44: #{tpu_custom_call.1} parent=27 // pred_fallthru
          _
        %s1494 = sand.u32 %s79, 1
        %s1495 = scalar_lea.sflag [#allocation6], %s1494
        %s1496 = sand.u32 %s79, 1
        %s1497 = smul.addr %s1496, 32
        %s1498 = scalar_lea.vmem [#allocation9], %s1497
        // Predicated region
        $region45: #{tpu_custom_call.1} parent=27 // pred_check
          %p1499 = pneg %p89
        $region46: #{tpu_custom_call.1} parent=27 // pred_check_branch
          %1501 = sbr.rel (%p1499) target = $region48
        $region47: #{tpu_custom_call.1} parent=27 // pred_region
          %s1502 = smul.u32 8, %s24
          %1504 = vsyncadd %s1495, 0
          %s1505 = smul.addr %s1502, 4
          %s1506 = scalar_lea.hbm %s2, %s1505
          %s1507 = sshll.u32 %s1498, 4
          %s1508 = int_to_ptr.vmem [resolvable:$true] %s1507
          %s1509 = sshll.u32 %s1506, 4
          %s1510 = int_to_ptr.hbm [resolvable:$true] %s1509
          %1515 = dma.vmem_to_hbm [thread:$0]  %s1508, 512, %s1510, %s1495, 64, 64, 4
        $region48: #{tpu_custom_call.1} parent=27 // pred_fallthru
          _
        // Predicated region
        $region49: #{tpu_custom_call.1} parent=27 // pred_check
          %p1516 = pneg %p110
        $region50: #{tpu_custom_call.1} parent=27 // pred_check_branch
          %1518 = sbr.rel (%p1516) target = $region52
        $region51: #{tpu_custom_call.1} parent=27 // pred_region
          %1520 = vsyncadd [#allocation11], 0
          %s1522 = sshll.u32 [#allocation10], 4
          %s1523 = int_to_ptr.vmem [resolvable:$true] %s1522
          %s1524 = sshll.u32 %s3, 4
          %s1525 = int_to_ptr.hbm [resolvable:$true] %s1524
          %1527 = dma.vmem_to_hbm [thread:$0]  %s1523, 128, %s1525, [#allocation11]
        $region52: #{tpu_custom_call.1} parent=27 // pred_fallthru
          _
        // Predicated region
        $region53: #{tpu_custom_call.1} parent=27 // pred_check
          %p1528 = pneg %p131
        $region54: #{tpu_custom_call.1} parent=27 // pred_check_branch
          %1530 = sbr.rel (%p1528) target = $region56
        $region55: #{tpu_custom_call.1} parent=27 // pred_region
          %1532 = vsyncadd [#allocation11], 0
          %s1534 = sshll.u32 [#allocation12], 4
          %s1535 = int_to_ptr.vmem [resolvable:$true] %s1534
          %s1536 = sshll.u32 %s4, 4
          %s1537 = int_to_ptr.hbm [resolvable:$true] %s1536
          %1539 = dma.vmem_to_hbm [thread:$0]  %s1535, 128, %s1537, [#allocation11]
        $region56: #{tpu_custom_call.1} parent=27 // pred_fallthru
          _
        // Predicated region
        $region57: #{tpu_custom_call.1} parent=27 // pred_check
          %p1540 = pneg %p110
        $region58: #{tpu_custom_call.1} parent=27 // pred_check_branch
          %1542 = sbr.rel (%p1540) target = $region60
        $region59: #{tpu_custom_call.1} parent=27 // pred_region
          %1544 = dma.done [#allocation11], 128
        $region60: #{tpu_custom_call.1} parent=27 // pred_fallthru
          _
        // Predicated region
        $region61: #{tpu_custom_call.1} parent=27 // pred_check
          %p1545 = pneg %p131
        $region62: #{tpu_custom_call.1} parent=27 // pred_check_branch
          %1547 = sbr.rel (%p1545) target = $region64
        $region63: #{tpu_custom_call.1} parent=27 // pred_region
          %1549 = dma.done [#allocation11], 128
        $region64: #{tpu_custom_call.1} parent=27 // pred_fallthru
          _
      $region28: #{tpu_custom_call.1} parent=5 // pred_fallthru
        _
      %p1550 = scmp.le.s32.totalorder 2, %s19
      // Predicated region
      $region65: #{tpu_custom_call.1} parent=5 // pred_check
        %p1551 = pneg %p1550
      $region66: #{tpu_custom_call.1} parent=5 // pred_check_branch
        %1553 = sbr.rel (%p1551) target = $region68
      $region67: #{tpu_custom_call.1} parent=5 // pred_region
        %s1554 = ssub.s32 %s19, 2
        // Predicated region
        $region69: #{tpu_custom_call.1} parent=67 // pred_check
          %p1555 = pneg %p95
        $region70: #{tpu_custom_call.1} parent=67 // pred_check_branch
          %1557 = sbr.rel (%p1555) target = $region72
        $region71: #{tpu_custom_call.1} parent=67 // pred_region
          %s1558 = sand.u32 %s80, 1
          %s1559 = scalar_lea.sflag [#allocation6], %s1558
          %s1560 = sand.u32 %s80, 1
          %s1561 = smul.addr %s1560, 32
          %s1562 = scalar_lea.vmem [#allocation9], %s1561
          %1564 = dma.done %s1559, 512
        $region72: #{tpu_custom_call.1} parent=67 // pred_fallthru
          _
      $region68: #{tpu_custom_call.1} parent=5 // pred_fallthru
        _
    $region6: #{tpu_custom_call.1} parent=1 // loop_footer
      %s23 = sadd.s32 1, %s19
    $region7: #{tpu_custom_call.1} parent=1 // loop_footer_branch
      %18 = sbr.rel target = $region3
    $region8: #{tpu_custom_call.1} parent=1 // loop_exit
      _
    %1565 = vsyncpa [#allocation5], 1
    %s1566 = scalar_lea.sflag [#allocation5], 1
    %1567 = vsyncpa %s1566, 1
    %1568 = vsyncpa [#allocation8], 1
    %1569 = vsyncpa [#allocation6], 1
    %s1570 = scalar_lea.sflag [#allocation6], 1
    %1571 = vsyncpa %s1570, 1
    %1572 = vsyncpa [#allocation11], 1

</llo_original>
